<compile_context>
chip_gen: v7x
topology: tpu7x:2x2x1
jax: 0.10.0
libtpu: 0.0.40
codegen_flags: <defaults>
</compile_context>

<pallas_src>
import jax
import jax.numpy as jnp
from jax.experimental import pallas as pl
from jax.experimental.pallas import tpu as pltpu


def _round_up(x, m):
    return ((x + m - 1) // m) * m


def _vmem_budget():
    # Generation-aware VMEM budget: ~75% of physical (v5e/v6e: 128 MiB,
    # v7x: 64 MiB), capped, with a conservative fallback.
    try:
        cap = int(pltpu.get_tpu_info().vmem_capacity_bytes)
        return max(32 * 1024 * 1024, min((cap * 3) // 4, 96 * 1024 * 1024))
    except Exception:
        return 32 * 1024 * 1024


# ----------------------------------------------------------- encoder kernel --
def make_encoder_kernel(b_pad, h_pad):
    def kernel(x_ref, len_ref, w_x_ref, u_h_ref, b_x_ref, b_h_ref, hfin_ref):
        tb, e_pad = x_ref.shape                 # tb = T * b_pad (pre-flattened)
        T = tb // b_pad
        lens = len_ref[...]                     # [B_pad, 1] int32 (0 on pad rows)
        u_h = u_h_ref[...]                      # [H_pad, 3H_pad] bf16
        b_h = b_h_ref[...]                      # [1, 3H_pad] f32

        # Hoisted time-batched input projection: ONE [T*B, E] @ [E, 3H] matmul
        # (fills MXU rows) instead of T tiny M=8 matmuls inside the recurrence.
        gx_all = jnp.dot(x_ref[...], w_x_ref[...],
                         preferred_element_type=jnp.float32) + b_x_ref[...]

        h = jnp.zeros((b_pad, h_pad), jnp.float32)
        # TODO(synk): for large T, stream x over a T-chunked grid (BlockSpec)
        # and use lax.fori_loop(unroll=2..4) to bound VMEM / vreg live ranges.
        for t in range(T):
            gx = gx_all[t * b_pad:(t + 1) * b_pad, :]
            gh = jnp.dot(h.astype(jnp.bfloat16), u_h,
                         preferred_element_type=jnp.float32) + b_h
            r = jax.nn.sigmoid(gx[:, :h_pad] + gh[:, :h_pad])
            z = jax.nn.sigmoid(gx[:, h_pad:2 * h_pad] + gh[:, h_pad:2 * h_pad])
            n = jnp.tanh(gx[:, 2 * h_pad:] + r * gh[:, 2 * h_pad:])
            h_new = (1.0 - z) * n + z * h
            h = jnp.where(t < lens, h_new, h)   # respect per-row lengths
        hfin_ref[...] = h

    return kernel


def run_encoder(x_flat, lens, params, b_pad):
    dims = params["dims"]
    h_pad = dims["h_pad"]
    return pl.pallas_call(
        make_encoder_kernel(b_pad, h_pad),
        out_shape=jax.ShapeDtypeStruct((b_pad, h_pad), jnp.float32),
        compiler_params=pltpu.CompilerParams(vmem_limit_bytes=_vmem_budget()),
    )(x_flat, lens, params["enc_wx"], params["enc_uh"],
      params["enc_bx"], params["enc_bh"])


# ------------------------------------------------------ fused decoder kernel --
def make_decoder_kernel(S, b_pad, h_pad, e_pad, v_pad, vocab, training,
                        feedback_infer):
    b2 = 2 * b_pad
    bf16 = jnp.bfloat16

    def gate(gx, gh, h):
        r = jax.nn.sigmoid(gx[:, :h_pad] + gh[:, :h_pad])
        z = jax.nn.sigmoid(gx[:, h_pad:2 * h_pad] + gh[:, h_pad:2 * h_pad])
        n = jnp.tanh(gx[:, 2 * h_pad:] + r * gh[:, 2 * h_pad:])
        return (1.0 - z) * n + z * h

    def kernel(x_step_ref, h0_ref, emb_ref,
               w_x_ref, u_h_ref, b_x_ref, b_h_ref, w_out_ref, b_out_ref,
               logits_ref, h_scr, x_scr):
        c = pl.program_id(0)

        @pl.when(c == 0)
        def _init():
            h0 = h0_ref[...]
            h_scr[:b_pad, :] = h0               # decoder branch
            h_scr[b_pad:, :] = h0               # infer branch
            if not training:
                x_scr[...] = x_step_ref[...]    # emb[<go>] (bf16)

        w_x = w_x_ref[...]
        u_h = u_h_ref[...]
        b_x = b_x_ref[...]
        b_h = b_h_ref[...]
        w_out = w_out_ref[...]
        b_out = b_out_ref[...]

        if training:
            # Hoisted per-chunk input projection over the teacher stream:
            # one [S*B, E] @ [E, 3H] matmul instead of S tiny ones.
            gx_all = jnp.dot(x_step_ref[...], w_x,
                             preferred_element_type=jnp.float32) + b_x

        for s in range(S):
            if training:
                gx1 = gx_all[s * b_pad:(s + 1) * b_pad, :]
            else:
                gx1 = jnp.dot(x_scr[...], w_x,
                              preferred_element_type=jnp.float32) + b_x

            h2 = h_scr[...]                     # [2B, H] (decoder ; infer)
            gh = jnp.dot(h2.astype(bf16), u_h,
                         preferred_element_type=jnp.float32) + b_h
            # same x feeds both twin halves: reuse gx1, no concatenate
            h_dec = gate(gx1, gh[:b_pad], h2[:b_pad])
            h_inf = gate(gx1, gh[b_pad:], h2[b_pad:])
            h_scr[:b_pad, :] = h_dec
            h_scr[b_pad:, :] = h_inf
            h_new = h_scr[...]

            # vocab projection for both branches at once (lane-dense [2B, Vp])
            logits = jnp.dot(h_new.astype(bf16), w_out,
                             preferred_element_type=jnp.float32) + b_out
            logits_ref[s] = logits

            if not training:
                # autoregressive feedback: first-occurrence argmax over the
                # real vocab on the feedback branch only, then one-hot @ emb.
                # TODO(synk): at large vocab replace with SMEM argmax + DMA
                # row gather from an HBM-resident embedding table.
                fb = logits[b_pad:] if feedback_infer else logits[:b_pad]
                lane = jax.lax.broadcasted_iota(jnp.int32, (b_pad, v_pad), 1)
                masked = jnp.where(lane < vocab, fb, -1e30)
                m = jnp.max(masked, axis=-1, keepdims=True)
                first = jnp.min(jnp.where(masked == m, lane, v_pad),
                                axis=-1, keepdims=True)
                onehot = (lane == first).astype(bf16)
                x_scr[...] = jnp.dot(onehot, emb_ref[...],
                                     preferred_element_type=jnp.float32
                                     ).astype(bf16)

    return kernel


def run_decoder(x_static, h0, params, n_chunks, S, training, train_infer):
    dims = params["dims"]
    b_pad = h0.shape[0]
    h_pad, e_pad, v_pad = dims["h_pad"], dims["e_pad"], dims["v_pad"]
    b2 = 2 * b_pad
    max_len_pad = n_chunks * S

    def full(shape):
        return pl.BlockSpec(shape, lambda c, n=len(shape): (0,) * n)

    if training:
        # teacher stream pre-flattened to [max_len_pad*B, E]; one chunk / iter
        x_spec = pl.BlockSpec((S * b_pad, e_pad), lambda c: (c, 0))
    else:
        x_spec = pl.BlockSpec((b_pad, e_pad), lambda c: (0, 0))

    kernel = make_decoder_kernel(S, b_pad, h_pad, e_pad, v_pad, dims["vocab"],
                                 training, train_infer)

    # TODO(synk): audit buffer counts of the constant-index resident inputs
    # (emb, W_x, U_h, w_out) at scaled sizes; at demo sizes VMEM is trivial.
    grid_spec = pltpu.PrefetchScalarGridSpec(
        num_scalar_prefetch=0,
        grid=(n_chunks,),
        in_specs=[x_spec,
                  full((b_pad, h_pad)),            # encoder final state
                  full((v_pad, e_pad)),            # embedding table (bf16)
                  full((e_pad, 3 * h_pad)),        # dec W_x  (r|z|n fused)
                  full((h_pad, 3 * h_pad)),        # dec U_h
                  full((1, 3 * h_pad)),            # dec b_x
                  full((1, 3 * h_pad)),            # dec b_h
                  full((h_pad, v_pad)),            # w_out (bf16)
                  full((1, v_pad))],               # b_out
        out_specs=pl.BlockSpec((S, b2, v_pad), lambda c: (c, 0, 0)),
        scratch_shapes=[pltpu.VMEM((b2, h_pad), jnp.float32),     # [dec;inf] h
                        pltpu.VMEM((b_pad, e_pad), jnp.bfloat16)])  # fed-back emb

    return pl.pallas_call(
        kernel,
        out_shape=jax.ShapeDtypeStruct((max_len_pad, b2, v_pad), jnp.float32),
        grid_spec=grid_spec,
        compiler_params=pltpu.CompilerParams(
            dimension_semantics=("arbitrary",),    # sequential recurrence
            vmem_limit_bytes=_vmem_budget()),
    )(x_static, h0, params["embedding"],
      params["dec_wx"], params["dec_uh"], params["dec_bx"], params["dec_bh"],
      params["w_out"], params["b_out"])


# --------------------------------------------------------- Seq2Seq forward --
def seq2seq_forward(params, encoder_inputs, encoder_length, decoder_inputs,
                    go_tok, unk_tok, drop_key, train_infer=True, training=False,
                    word_drop=0.2, steps_per_block=4):
    """Returns stacked arrays (logits [max_len,B,V], symbols [max_len,B]) for
    the decoder and infer branches (== the original per-step lists, stacked)."""
    dims = params["dims"]
    vocab = dims["vocab"]
    e_pad = dims["e_pad"]
    emb = params["embedding"]                     # [V_pad, E_pad] bf16

    T_enc, B = encoder_inputs.shape
    max_len = decoder_inputs.shape[0]
    b_pad = _round_up(max(B, 8), 8)
    S = steps_per_block
    max_len_pad = _round_up(max_len, S)
    n_chunks = max_len_pad // S

    pad_b = lambda a: jnp.pad(a, [(0, 0)] * (a.ndim - 1) + [(0, b_pad - B)])
    enc_in = pad_b(encoder_inputs)
    dec_in = pad_b(decoder_inputs)
    go = pad_b(go_tok)
    unk = pad_b(unk_tok)
    lens = pad_b(encoder_length.astype(jnp.int32)).reshape(b_pad, 1)

    # encoder: embedding lookup (glue) + single fused recurrent kernel
    x_enc = emb[enc_in].reshape(T_enc * b_pad, e_pad)     # bf16, pre-flattened
    h0 = run_encoder(x_enc, lens, params, b_pad)          # [B_pad, H_pad] f32

    if training:
        # device-side word-drop mask (mirrors the per-step random.random())
        drops = jax.random.uniform(drop_key, (max_len,)) < word_drop
        rows1 = jnp.where(drops[:max_len - 1, None], unk[None, :],
                          dec_in[1:max_len])              # steps 1..max_len-1
        tokens = jnp.concatenate([go[None, :], rows1], axis=0)
        tokens = jnp.pad(tokens, ((0, max_len_pad - max_len), (0, 0)))
        x_static = emb[tokens].reshape(max_len_pad * b_pad, e_pad)
    else:
        x_static = emb[go]                                # [B_pad, E_pad] bf16

    logits_all = run_decoder(x_static, h0, params, n_chunks, S,
                             training, train_infer)       # [Lp, 2B_pad, V_pad]

    dec_logits = logits_all[:max_len, :B, :vocab]
    inf_logits = logits_all[:max_len, b_pad:b_pad + B, :vocab]
    dec_symbols = jnp.argmax(dec_logits, axis=-1).astype(jnp.int32)
    inf_symbols = jnp.argmax(inf_logits, axis=-1).astype(jnp.int32)
    return dec_logits, dec_symbols, inf_logits, inf_symbols


# ------------------------------------------------- pure-JAX reference model --
def _ref_gate(gx, gh, h, h_pad):
    r = jax.nn.sigmoid(gx[:, :h_pad] + gh[:, :h_pad])
    z = jax.nn.sigmoid(gx[:, h_pad:2 * h_pad] + gh[:, h_pad:2 * h_pad])
    n = jnp.tanh(gx[:, 2 * h_pad:] + r * gh[:, 2 * h_pad:])
    return (1.0 - z) * n + z * h


def reference_forward(params, encoder_inputs, encoder_length, decoder_inputs,
                      go_tok, unk_tok, drop_key, train_infer=True,
                      training=False, word_drop=0.2):
    """Plain-jnp mirror of the padded/bf16 kernel math (correctness oracle)."""
    dims = params["dims"]
    vocab, h_pad = dims["vocab"], dims["h_pad"]
    emb = params["embedding"]
    bf16 = jnp.bfloat16
    T, B = encoder_inputs.shape
    max_len = decoder_inputs.shape[0]
    b_pad = _round_up(max(B, 8), 8)
    pad_b = lambda a: jnp.pad(a, [(0, 0)] * (a.ndim - 1) + [(0, b_pad - B)])
    enc_in, dec_in = pad_b(encoder_inputs), pad_b(decoder_inputs)
    go, unk = pad_b(go_tok), pad_b(unk_tok)
    lens = pad_b(encoder_length.astype(jnp.int32)).reshape(b_pad, 1)

    x_emb = emb[enc_in]
    h = jnp.zeros((b_pad, h_pad), jnp.float32)
    for t in range(T):
        gx = jnp.dot(x_emb[t], params["enc_wx"],
                     preferred_element_type=jnp.float32) + params["enc_bx"]
        gh = jnp.dot(h.astype(bf16), params["enc_uh"],
                     preferred_element_type=jnp.float32) + params["enc_bh"]
        h = jnp.where(t < lens, _ref_gate(gx, gh, h, h_pad), h)

    if training:
        drops = jax.random.uniform(drop_key, (max_len,)) < word_drop
    h_dec, h_inf = h, h
    x = emb[go]
    dls, dss, ils, iss = [], [], [], []
    for s in range(max_len):
        if training and s > 0:
            x = emb[jnp.where(drops[s - 1], unk, dec_in[s])]
        gx = jnp.dot(x, params["dec_wx"],
                     preferred_element_type=jnp.float32) + params["dec_bx"]
        gh_d = jnp.dot(h_dec.astype(bf16), params["dec_uh"],
                       preferred_element_type=jnp.float32) + params["dec_bh"]
        gh_i = jnp.dot(h_inf.astype(bf16), params["dec_uh"],
                       preferred_element_type=jnp.float32) + params["dec_bh"]
        h_dec = _ref_gate(gx, gh_d, h_dec, h_pad)
        h_inf = _ref_gate(gx, gh_i, h_inf, h_pad)
        ld = jnp.dot(h_dec.astype(bf16), params["w_out"],
                     preferred_element_type=jnp.float32) + params["b_out"]
        li = jnp.dot(h_inf.astype(bf16), params["w_out"],
                     preferred_element_type=jnp.float32) + params["b_out"]
        sd = jnp.argmax(ld[:, :vocab], axis=-1).astype(jnp.int32)
        si = jnp.argmax(li[:, :vocab], axis=-1).astype(jnp.int32)
        dls.append(ld[:B, :vocab]); ils.append(li[:B, :vocab])
        dss.append(sd[:B]); iss.append(si[:B])
        if not training:
            x = emb[si if train_infer else sd]
    return jnp.stack(dls), jnp.stack(dss), jnp.stack(ils), jnp.stack(iss)


# ------------------------------------------------------------------ params --
def init_params(key, vocab, embed, hidden):
    v_pad = _round_up(vocab, 128)
    e_pad = _round_up(embed, 128)
    h_pad = _round_up(hidden, 128)

    ks = iter(jax.random.split(key, 32))
    rnd = lambda shape: (0.1 * jax.random.normal(next(ks), shape)).astype(jnp.float32)

    def pad2(a, shape):
        return jnp.pad(a, [(0, s - d) for d, s in zip(a.shape, shape)])

    p = {
        "dims": dict(vocab=vocab, embed=embed, hidden=hidden,
                     v_pad=v_pad, e_pad=e_pad, h_pad=h_pad),
        "embedding": pad2(rnd((vocab, embed)), (v_pad, e_pad)).astype(jnp.bfloat16),
        "w_out": pad2(rnd((hidden, vocab)), (h_pad, v_pad)).astype(jnp.bfloat16),
        "b_out": pad2(rnd((1, vocab)), (1, v_pad)),
    }
    # fused gate layout [r | z | n]; PyTorch GRUCell keeps separate x / h biases
    for pre in ("enc", "dec"):
        wx = [pad2(rnd((embed, hidden)), (e_pad, h_pad)) for _ in range(3)]
        uh = [pad2(rnd((hidden, hidden)), (h_pad, h_pad)) for _ in range(3)]
        bx = [pad2(rnd((1, hidden)), (1, h_pad)) for _ in range(3)]
        bh = [pad2(rnd((1, hidden)), (1, h_pad)) for _ in range(3)]
        p[f"{pre}_wx"] = jnp.concatenate(wx, axis=1).astype(jnp.bfloat16)
        p[f"{pre}_uh"] = jnp.concatenate(uh, axis=1).astype(jnp.bfloat16)
        p[f"{pre}_bx"] = jnp.concatenate(bx, axis=1)
        p[f"{pre}_bh"] = jnp.concatenate(bh, axis=1)
    return p


if __name__ == "__main__":
    VOCAB, EMBED, HIDDEN = 32, 16, 32
    B, T_ENC, MAX_LEN = 4, 6, 10
    GO, UNK = 1, 2

    key = jax.random.PRNGKey(0)
    kp, ke, kl, kd, kdrop = jax.random.split(key, 5)
    params = init_params(kp, VOCAB, EMBED, HIDDEN)

    encoder_inputs = jax.random.randint(ke, (T_ENC, B), 0, VOCAB, dtype=jnp.int32)
    encoder_length = jax.random.randint(kl, (B,), 1, T_ENC + 1, dtype=jnp.int32)
    decoder_inputs = jax.random.randint(kd, (MAX_LEN, B), 0, VOCAB, dtype=jnp.int32)
    go_tok = jnp.full((B,), GO, dtype=jnp.int32)
    unk_tok = jnp.full((B,), UNK, dtype=jnp.int32)

    # ---------------- inference mode (autoregressive feedback, infer branch) --
    dec_l, dec_s, inf_l, inf_s = seq2seq_forward(
        params, encoder_inputs, encoder_length, decoder_inputs,
        go_tok, unk_tok, kdrop, train_infer=True, training=False)
    jax.block_until_ready((dec_l, dec_s, inf_l, inf_s))

    assert dec_l.shape == (MAX_LEN, B, VOCAB) and inf_l.shape == (MAX_LEN, B, VOCAB)
    assert dec_s.shape == (MAX_LEN, B) and dec_s.dtype == jnp.int32
    assert bool(jnp.all(jnp.isfinite(dec_l))) and bool(jnp.all(jnp.isfinite(inf_l)))
    assert bool(jnp.all((dec_s >= 0) & (dec_s < VOCAB)))

    rd_l, _, ri_l, _ = reference_forward(
        params, encoder_inputs, encoder_length, decoder_inputs,
        go_tok, unk_tok, kdrop, train_infer=True, training=False)
    # compare the first autoregressive steps (beyond that, ~1e-5 numeric noise
    # could in principle flip a near-tied argmax and fork the trajectory)
    assert bool(jnp.allclose(dec_l[:2], rd_l[:2], atol=2e-2, rtol=2e-2))
    assert bool(jnp.allclose(inf_l[:2], ri_l[:2], atol=2e-2, rtol=2e-2))

    # ---------------- training mode (teacher forcing + word drop, no feedback) --
    tdl, tds, til, tis = seq2seq_forward(
        params, encoder_inputs, encoder_length, decoder_inputs,
        go_tok, unk_tok, kdrop, train_infer=True, training=True)
    jax.block_until_ready((tdl, tds, til, tis))
    rtdl, _, rtil, _ = reference_forward(
        params, encoder_inputs, encoder_length, decoder_inputs,
        go_tok, unk_tok, kdrop, train_infer=True, training=True)
    assert tdl.shape == (MAX_LEN, B, VOCAB) and tds.shape == (MAX_LEN, B)
    assert bool(jnp.allclose(tdl, rtdl, atol=3e-2, rtol=3e-2))
    assert bool(jnp.allclose(til, rtil, atol=3e-2, rtol=3e-2))

    print("KERNEL_OK")
</pallas_src>

<mosaic_0001>
module attributes {stable_mosaic.version = 11 : i64} {
  func.func @kernel(%arg0: memref<48x128xbf16, #tpu.memory_space<vmem>>, %arg1: memref<8x1xi32, #tpu.memory_space<vmem>>, %arg2: memref<128x384xbf16, #tpu.memory_space<vmem>>, %arg3: memref<128x384xbf16, #tpu.memory_space<vmem>>, %arg4: memref<1x384xf32, #tpu.memory_space<vmem>>, %arg5: memref<1x384xf32, #tpu.memory_space<vmem>>, %arg6: memref<8x128xf32, #tpu.memory_space<vmem>>) attributes {dimension_semantics = [], scalar_prefetch = 0 : i64, scratch_operands = 0 : i64, tpu.core_type = #tpu.core_type<tc>} {
    %c0 = arith.constant 0 : index
    %c0_0 = arith.constant 0 : index
    %0 = vector.load %arg1[%c0, %c0_0] : memref<8x1xi32, #tpu.memory_space<vmem>>, vector<8x1xi32>
    %c0_1 = arith.constant 0 : index
    %c0_2 = arith.constant 0 : index
    %1 = vector.load %arg3[%c0_1, %c0_2] : memref<128x384xbf16, #tpu.memory_space<vmem>>, vector<128x384xbf16>
    %c0_3 = arith.constant 0 : index
    %c0_4 = arith.constant 0 : index
    %2 = vector.load %arg5[%c0_3, %c0_4] : memref<1x384xf32, #tpu.memory_space<vmem>>, vector<1x384xf32>
    %c0_5 = arith.constant 0 : index
    %c0_6 = arith.constant 0 : index
    %3 = vector.load %arg0[%c0_5, %c0_6] : memref<48x128xbf16, #tpu.memory_space<vmem>>, vector<48x128xbf16>
    %c0_7 = arith.constant 0 : index
    %c0_8 = arith.constant 0 : index
    %4 = vector.load %arg2[%c0_7, %c0_8] : memref<128x384xbf16, #tpu.memory_space<vmem>>, vector<128x384xbf16>
    %cst = arith.constant dense<0.000000e+00> : vector<48x384xf32>
    %5 = tpu.matmul %3, %4, %cst {dimension_numbers = #tpu.dot_dimension_numbers<[1], [0], [0], [1], [0, 0, 1, 1], [], []>} : vector<48x128xbf16>, vector<128x384xbf16>, vector<48x384xf32> -> vector<48x384xf32>
    %c0_9 = arith.constant 0 : index
    %c0_10 = arith.constant 0 : index
    %6 = vector.load %arg4[%c0_9, %c0_10] : memref<1x384xf32, #tpu.memory_space<vmem>>, vector<1x384xf32>
    %7 = vector.broadcast %6 : vector<1x384xf32> to vector<48x384xf32>
    %8 = arith.addf %5, %7 : vector<48x384xf32>
    %cst_11 = arith.constant 0.000000e+00 : f32
    %9 = vector.broadcast %cst_11 : f32 to vector<8x128xf32>
    %10 = vector.extract_strided_slice %8 {offsets = [0, 0], sizes = [8, 384], strides = [1, 1]} : vector<48x384xf32> to vector<8x384xf32>
    %11 = arith.truncf %9 : vector<8x128xf32> to vector<8x128xbf16>
    %cst_12 = arith.constant dense<0.000000e+00> : vector<8x384xf32>
    %12 = tpu.matmul %11, %1, %cst_12 {dimension_numbers = #tpu.dot_dimension_numbers<[1], [0], [0], [1], [0, 0, 1, 1], [], []>} : vector<8x128xbf16>, vector<128x384xbf16>, vector<8x384xf32> -> vector<8x384xf32>
    %13 = vector.broadcast %2 : vector<1x384xf32> to vector<8x384xf32>
    %14 = arith.addf %12, %13 : vector<8x384xf32>
    %15 = vector.extract_strided_slice %10 {offsets = [0, 0], sizes = [8, 128], strides = [1, 1]} : vector<8x384xf32> to vector<8x128xf32>
    %16 = vector.extract_strided_slice %14 {offsets = [0, 0], sizes = [8, 128], strides = [1, 1]} : vector<8x384xf32> to vector<8x128xf32>
    %17 = arith.addf %15, %16 : vector<8x128xf32>
    %18 = arith.negf %17 : vector<8x128xf32>
    %19 = math.exp %18 : vector<8x128xf32>
    %cst_13 = arith.constant 1.000000e+00 : f32
    %20 = vector.broadcast %cst_13 : f32 to vector<8x128xf32>
    %21 = arith.addf %20, %19 : vector<8x128xf32>
    %22 = arith.divf %20, %21 : vector<8x128xf32>
    %23 = vector.extract_strided_slice %10 {offsets = [0, 128], sizes = [8, 128], strides = [1, 1]} : vector<8x384xf32> to vector<8x128xf32>
    %24 = vector.extract_strided_slice %14 {offsets = [0, 128], sizes = [8, 128], strides = [1, 1]} : vector<8x384xf32> to vector<8x128xf32>
    %25 = arith.addf %23, %24 : vector<8x128xf32>
    %26 = arith.negf %25 : vector<8x128xf32>
    %27 = math.exp %26 : vector<8x128xf32>
    %cst_14 = arith.constant 1.000000e+00 : f32
    %28 = vector.broadcast %cst_14 : f32 to vector<8x128xf32>
    %29 = arith.addf %28, %27 : vector<8x128xf32>
    %30 = arith.divf %28, %29 : vector<8x128xf32>
    %31 = vector.extract_strided_slice %10 {offsets = [0, 256], sizes = [8, 128], strides = [1, 1]} : vector<8x384xf32> to vector<8x128xf32>
    %32 = vector.extract_strided_slice %14 {offsets = [0, 256], sizes = [8, 128], strides = [1, 1]} : vector<8x384xf32> to vector<8x128xf32>
    %33 = arith.mulf %22, %32 : vector<8x128xf32>
    %34 = arith.addf %31, %33 : vector<8x128xf32>
    %35 = math.tanh %34 : vector<8x128xf32>
    %cst_15 = arith.constant 1.000000e+00 : f32
    %36 = vector.broadcast %cst_15 : f32 to vector<8x128xf32>
    %37 = arith.subf %36, %30 : vector<8x128xf32>
    %38 = arith.mulf %37, %35 : vector<8x128xf32>
    %39 = arith.mulf %30, %9 : vector<8x128xf32>
    %40 = arith.addf %38, %39 : vector<8x128xf32>
    %c0_i32 = arith.constant 0 : i32
    %41 = vector.broadcast %c0_i32 : i32 to vector<8x1xi32>
    %42 = arith.cmpi sgt, %0, %41 : vector<8x1xi32>
    %43 = vector.shape_cast %42 : vector<8x1xi1> to vector<8x1xi1>
    %44 = vector.broadcast %43 : vector<8x1xi1> to vector<8x128xi1>
    %45 = arith.select %44, %40, %9 : vector<8x128xi1>, vector<8x128xf32>
    %46 = vector.extract_strided_slice %8 {offsets = [8, 0], sizes = [8, 384], strides = [1, 1]} : vector<48x384xf32> to vector<8x384xf32>
    %47 = arith.truncf %45 : vector<8x128xf32> to vector<8x128xbf16>
    %cst_16 = arith.constant dense<0.000000e+00> : vector<8x384xf32>
    %48 = tpu.matmul %47, %1, %cst_16 {dimension_numbers = #tpu.dot_dimension_numbers<[1], [0], [0], [1], [0, 0, 1, 1], [], []>} : vector<8x128xbf16>, vector<128x384xbf16>, vector<8x384xf32> -> vector<8x384xf32>
    %49 = vector.broadcast %2 : vector<1x384xf32> to vector<8x384xf32>
    %50 = arith.addf %48, %49 : vector<8x384xf32>
    %51 = vector.extract_strided_slice %46 {offsets = [0, 0], sizes = [8, 128], strides = [1, 1]} : vector<8x384xf32> to vector<8x128xf32>
    %52 = vector.extract_strided_slice %50 {offsets = [0, 0], sizes = [8, 128], strides = [1, 1]} : vector<8x384xf32> to vector<8x128xf32>
    %53 = arith.addf %51, %52 : vector<8x128xf32>
    %54 = arith.negf %53 : vector<8x128xf32>
    %55 = math.exp %54 : vector<8x128xf32>
    %cst_17 = arith.constant 1.000000e+00 : f32
    %56 = vector.broadcast %cst_17 : f32 to vector<8x128xf32>
    %57 = arith.addf %56, %55 : vector<8x128xf32>
    %58 = arith.divf %56, %57 : vector<8x128xf32>
    %59 = vector.extract_strided_slice %46 {offsets = [0, 128], sizes = [8, 128], strides = [1, 1]} : vector<8x384xf32> to vector<8x128xf32>
    %60 = vector.extract_strided_slice %50 {offsets = [0, 128], sizes = [8, 128], strides = [1, 1]} : vector<8x384xf32> to vector<8x128xf32>
    %61 = arith.addf %59, %60 : vector<8x128xf32>
    %62 = arith.negf %61 : vector<8x128xf32>
    %63 = math.exp %62 : vector<8x128xf32>
    %cst_18 = arith.constant 1.000000e+00 : f32
    %64 = vector.broadcast %cst_18 : f32 to vector<8x128xf32>
    %65 = arith.addf %64, %63 : vector<8x128xf32>
    %66 = arith.divf %64, %65 : vector<8x128xf32>
    %67 = vector.extract_strided_slice %46 {offsets = [0, 256], sizes = [8, 128], strides = [1, 1]} : vector<8x384xf32> to vector<8x128xf32>
    %68 = vector.extract_strided_slice %50 {offsets = [0, 256], sizes = [8, 128], strides = [1, 1]} : vector<8x384xf32> to vector<8x128xf32>
    %69 = arith.mulf %58, %68 : vector<8x128xf32>
    %70 = arith.addf %67, %69 : vector<8x128xf32>
    %71 = math.tanh %70 : vector<8x128xf32>
    %cst_19 = arith.constant 1.000000e+00 : f32
    %72 = vector.broadcast %cst_19 : f32 to vector<8x128xf32>
    %73 = arith.subf %72, %66 : vector<8x128xf32>
    %74 = arith.mulf %73, %71 : vector<8x128xf32>
    %75 = arith.mulf %66, %45 : vector<8x128xf32>
    %76 = arith.addf %74, %75 : vector<8x128xf32>
    %c1_i32 = arith.constant 1 : i32
    %77 = vector.broadcast %c1_i32 : i32 to vector<8x1xi32>
    %78 = arith.cmpi sgt, %0, %77 : vector<8x1xi32>
    %79 = vector.shape_cast %78 : vector<8x1xi1> to vector<8x1xi1>
    %80 = vector.broadcast %79 : vector<8x1xi1> to vector<8x128xi1>
    %81 = arith.select %80, %76, %45 : vector<8x128xi1>, vector<8x128xf32>
    %82 = vector.extract_strided_slice %8 {offsets = [16, 0], sizes = [8, 384], strides = [1, 1]} : vector<48x384xf32> to vector<8x384xf32>
    %83 = arith.truncf %81 : vector<8x128xf32> to vector<8x128xbf16>
    %cst_20 = arith.constant dense<0.000000e+00> : vector<8x384xf32>
    %84 = tpu.matmul %83, %1, %cst_20 {dimension_numbers = #tpu.dot_dimension_numbers<[1], [0], [0], [1], [0, 0, 1, 1], [], []>} : vector<8x128xbf16>, vector<128x384xbf16>, vector<8x384xf32> -> vector<8x384xf32>
    %85 = vector.broadcast %2 : vector<1x384xf32> to vector<8x384xf32>
    %86 = arith.addf %84, %85 : vector<8x384xf32>
    %87 = vector.extract_strided_slice %82 {offsets = [0, 0], sizes = [8, 128], strides = [1, 1]} : vector<8x384xf32> to vector<8x128xf32>
    %88 = vector.extract_strided_slice %86 {offsets = [0, 0], sizes = [8, 128], strides = [1, 1]} : vector<8x384xf32> to vector<8x128xf32>
    %89 = arith.addf %87, %88 : vector<8x128xf32>
    %90 = arith.negf %89 : vector<8x128xf32>
    %91 = math.exp %90 : vector<8x128xf32>
    %cst_21 = arith.constant 1.000000e+00 : f32
    %92 = vector.broadcast %cst_21 : f32 to vector<8x128xf32>
    %93 = arith.addf %92, %91 : vector<8x128xf32>
    %94 = arith.divf %92, %93 : vector<8x128xf32>
    %95 = vector.extract_strided_slice %82 {offsets = [0, 128], sizes = [8, 128], strides = [1, 1]} : vector<8x384xf32> to vector<8x128xf32>
    %96 = vector.extract_strided_slice %86 {offsets = [0, 128], sizes = [8, 128], strides = [1, 1]} : vector<8x384xf32> to vector<8x128xf32>
    %97 = arith.addf %95, %96 : vector<8x128xf32>
    %98 = arith.negf %97 : vector<8x128xf32>
    %99 = math.exp %98 : vector<8x128xf32>
    %cst_22 = arith.constant 1.000000e+00 : f32
    %100 = vector.broadcast %cst_22 : f32 to vector<8x128xf32>
    %101 = arith.addf %100, %99 : vector<8x128xf32>
    %102 = arith.divf %100, %101 : vector<8x128xf32>
    %103 = vector.extract_strided_slice %82 {offsets = [0, 256], sizes = [8, 128], strides = [1, 1]} : vector<8x384xf32> to vector<8x128xf32>
    %104 = vector.extract_strided_slice %86 {offsets = [0, 256], sizes = [8, 128], strides = [1, 1]} : vector<8x384xf32> to vector<8x128xf32>
    %105 = arith.mulf %94, %104 : vector<8x128xf32>
    %106 = arith.addf %103, %105 : vector<8x128xf32>
    %107 = math.tanh %106 : vector<8x128xf32>
    %cst_23 = arith.constant 1.000000e+00 : f32
    %108 = vector.broadcast %cst_23 : f32 to vector<8x128xf32>
    %109 = arith.subf %108, %102 : vector<8x128xf32>
    %110 = arith.mulf %109, %107 : vector<8x128xf32>
    %111 = arith.mulf %102, %81 : vector<8x128xf32>
    %112 = arith.addf %110, %111 : vector<8x128xf32>
    %c2_i32 = arith.constant 2 : i32
    %113 = vector.broadcast %c2_i32 : i32 to vector<8x1xi32>
    %114 = arith.cmpi sgt, %0, %113 : vector<8x1xi32>
    %115 = vector.shape_cast %114 : vector<8x1xi1> to vector<8x1xi1>
    %116 = vector.broadcast %115 : vector<8x1xi1> to vector<8x128xi1>
    %117 = arith.select %116, %112, %81 : vector<8x128xi1>, vector<8x128xf32>
    %118 = vector.extract_strided_slice %8 {offsets = [24, 0], sizes = [8, 384], strides = [1, 1]} : vector<48x384xf32> to vector<8x384xf32>
    %119 = arith.truncf %117 : vector<8x128xf32> to vector<8x128xbf16>
    %cst_24 = arith.constant dense<0.000000e+00> : vector<8x384xf32>
    %120 = tpu.matmul %119, %1, %cst_24 {dimension_numbers = #tpu.dot_dimension_numbers<[1], [0], [0], [1], [0, 0, 1, 1], [], []>} : vector<8x128xbf16>, vector<128x384xbf16>, vector<8x384xf32> -> vector<8x384xf32>
    %121 = vector.broadcast %2 : vector<1x384xf32> to vector<8x384xf32>
    %122 = arith.addf %120, %121 : vector<8x384xf32>
    %123 = vector.extract_strided_slice %118 {offsets = [0, 0], sizes = [8, 128], strides = [1, 1]} : vector<8x384xf32> to vector<8x128xf32>
    %124 = vector.extract_strided_slice %122 {offsets = [0, 0], sizes = [8, 128], strides = [1, 1]} : vector<8x384xf32> to vector<8x128xf32>
    %125 = arith.addf %123, %124 : vector<8x128xf32>
    %126 = arith.negf %125 : vector<8x128xf32>
    %127 = math.exp %126 : vector<8x128xf32>
    %cst_25 = arith.constant 1.000000e+00 : f32
    %128 = vector.broadcast %cst_25 : f32 to vector<8x128xf32>
    %129 = arith.addf %128, %127 : vector<8x128xf32>
    %130 = arith.divf %128, %129 : vector<8x128xf32>
    %131 = vector.extract_strided_slice %118 {offsets = [0, 128], sizes = [8, 128], strides = [1, 1]} : vector<8x384xf32> to vector<8x128xf32>
    %132 = vector.extract_strided_slice %122 {offsets = [0, 128], sizes = [8, 128], strides = [1, 1]} : vector<8x384xf32> to vector<8x128xf32>
    %133 = arith.addf %131, %132 : vector<8x128xf32>
    %134 = arith.negf %133 : vector<8x128xf32>
    %135 = math.exp %134 : vector<8x128xf32>
    %cst_26 = arith.constant 1.000000e+00 : f32
    %136 = vector.broadcast %cst_26 : f32 to vector<8x128xf32>
    %137 = arith.addf %136, %135 : vector<8x128xf32>
    %138 = arith.divf %136, %137 : vector<8x128xf32>
    %139 = vector.extract_strided_slice %118 {offsets = [0, 256], sizes = [8, 128], strides = [1, 1]} : vector<8x384xf32> to vector<8x128xf32>
    %140 = vector.extract_strided_slice %122 {offsets = [0, 256], sizes = [8, 128], strides = [1, 1]} : vector<8x384xf32> to vector<8x128xf32>
    %141 = arith.mulf %130, %140 : vector<8x128xf32>
    %142 = arith.addf %139, %141 : vector<8x128xf32>
    %143 = math.tanh %142 : vector<8x128xf32>
    %cst_27 = arith.constant 1.000000e+00 : f32
    %144 = vector.broadcast %cst_27 : f32 to vector<8x128xf32>
    %145 = arith.subf %144, %138 : vector<8x128xf32>
    %146 = arith.mulf %145, %143 : vector<8x128xf32>
    %147 = arith.mulf %138, %117 : vector<8x128xf32>
    %148 = arith.addf %146, %147 : vector<8x128xf32>
    %c3_i32 = arith.constant 3 : i32
    %149 = vector.broadcast %c3_i32 : i32 to vector<8x1xi32>
    %150 = arith.cmpi sgt, %0, %149 : vector<8x1xi32>
    %151 = vector.shape_cast %150 : vector<8x1xi1> to vector<8x1xi1>
    %152 = vector.broadcast %151 : vector<8x1xi1> to vector<8x128xi1>
    %153 = arith.select %152, %148, %117 : vector<8x128xi1>, vector<8x128xf32>
    %154 = vector.extract_strided_slice %8 {offsets = [32, 0], sizes = [8, 384], strides = [1, 1]} : vector<48x384xf32> to vector<8x384xf32>
    %155 = arith.truncf %153 : vector<8x128xf32> to vector<8x128xbf16>
    %cst_28 = arith.constant dense<0.000000e+00> : vector<8x384xf32>
    %156 = tpu.matmul %155, %1, %cst_28 {dimension_numbers = #tpu.dot_dimension_numbers<[1], [0], [0], [1], [0, 0, 1, 1], [], []>} : vector<8x128xbf16>, vector<128x384xbf16>, vector<8x384xf32> -> vector<8x384xf32>
    %157 = vector.broadcast %2 : vector<1x384xf32> to vector<8x384xf32>
    %158 = arith.addf %156, %157 : vector<8x384xf32>
    %159 = vector.extract_strided_slice %154 {offsets = [0, 0], sizes = [8, 128], strides = [1, 1]} : vector<8x384xf32> to vector<8x128xf32>
    %160 = vector.extract_strided_slice %158 {offsets = [0, 0], sizes = [8, 128], strides = [1, 1]} : vector<8x384xf32> to vector<8x128xf32>
    %161 = arith.addf %159, %160 : vector<8x128xf32>
    %162 = arith.negf %161 : vector<8x128xf32>
    %163 = math.exp %162 : vector<8x128xf32>
    %cst_29 = arith.constant 1.000000e+00 : f32
    %164 = vector.broadcast %cst_29 : f32 to vector<8x128xf32>
    %165 = arith.addf %164, %163 : vector<8x128xf32>
    %166 = arith.divf %164, %165 : vector<8x128xf32>
    %167 = vector.extract_strided_slice %154 {offsets = [0, 128], sizes = [8, 128], strides = [1, 1]} : vector<8x384xf32> to vector<8x128xf32>
    %168 = vector.extract_strided_slice %158 {offsets = [0, 128], sizes = [8, 128], strides = [1, 1]} : vector<8x384xf32> to vector<8x128xf32>
    %169 = arith.addf %167, %168 : vector<8x128xf32>
    %170 = arith.negf %169 : vector<8x128xf32>
    %171 = math.exp %170 : vector<8x128xf32>
    %cst_30 = arith.constant 1.000000e+00 : f32
    %172 = vector.broadcast %cst_30 : f32 to vector<8x128xf32>
    %173 = arith.addf %172, %171 : vector<8x128xf32>
    %174 = arith.divf %172, %173 : vector<8x128xf32>
    %175 = vector.extract_strided_slice %154 {offsets = [0, 256], sizes = [8, 128], strides = [1, 1]} : vector<8x384xf32> to vector<8x128xf32>
    %176 = vector.extract_strided_slice %158 {offsets = [0, 256], sizes = [8, 128], strides = [1, 1]} : vector<8x384xf32> to vector<8x128xf32>
    %177 = arith.mulf %166, %176 : vector<8x128xf32>
    %178 = arith.addf %175, %177 : vector<8x128xf32>
    %179 = math.tanh %178 : vector<8x128xf32>
    %cst_31 = arith.constant 1.000000e+00 : f32
    %180 = vector.broadcast %cst_31 : f32 to vector<8x128xf32>
    %181 = arith.subf %180, %174 : vector<8x128xf32>
    %182 = arith.mulf %181, %179 : vector<8x128xf32>
    %183 = arith.mulf %174, %153 : vector<8x128xf32>
    %184 = arith.addf %182, %183 : vector<8x128xf32>
    %c4_i32 = arith.constant 4 : i32
    %185 = vector.broadcast %c4_i32 : i32 to vector<8x1xi32>
    %186 = arith.cmpi sgt, %0, %185 : vector<8x1xi32>
    %187 = vector.shape_cast %186 : vector<8x1xi1> to vector<8x1xi1>
    %188 = vector.broadcast %187 : vector<8x1xi1> to vector<8x128xi1>
    %189 = arith.select %188, %184, %153 : vector<8x128xi1>, vector<8x128xf32>
    %190 = vector.extract_strided_slice %8 {offsets = [40, 0], sizes = [8, 384], strides = [1, 1]} : vector<48x384xf32> to vector<8x384xf32>
    %191 = arith.truncf %189 : vector<8x128xf32> to vector<8x128xbf16>
    %cst_32 = arith.constant dense<0.000000e+00> : vector<8x384xf32>
    %192 = tpu.matmul %191, %1, %cst_32 {dimension_numbers = #tpu.dot_dimension_numbers<[1], [0], [0], [1], [0, 0, 1, 1], [], []>} : vector<8x128xbf16>, vector<128x384xbf16>, vector<8x384xf32> -> vector<8x384xf32>
    %193 = vector.broadcast %2 : vector<1x384xf32> to vector<8x384xf32>
    %194 = arith.addf %192, %193 : vector<8x384xf32>
    %195 = vector.extract_strided_slice %190 {offsets = [0, 0], sizes = [8, 128], strides = [1, 1]} : vector<8x384xf32> to vector<8x128xf32>
    %196 = vector.extract_strided_slice %194 {offsets = [0, 0], sizes = [8, 128], strides = [1, 1]} : vector<8x384xf32> to vector<8x128xf32>
    %197 = arith.addf %195, %196 : vector<8x128xf32>
    %198 = arith.negf %197 : vector<8x128xf32>
    %199 = math.exp %198 : vector<8x128xf32>
    %cst_33 = arith.constant 1.000000e+00 : f32
    %200 = vector.broadcast %cst_33 : f32 to vector<8x128xf32>
    %201 = arith.addf %200, %199 : vector<8x128xf32>
    %202 = arith.divf %200, %201 : vector<8x128xf32>
    %203 = vector.extract_strided_slice %190 {offsets = [0, 128], sizes = [8, 128], strides = [1, 1]} : vector<8x384xf32> to vector<8x128xf32>
    %204 = vector.extract_strided_slice %194 {offsets = [0, 128], sizes = [8, 128], strides = [1, 1]} : vector<8x384xf32> to vector<8x128xf32>
    %205 = arith.addf %203, %204 : vector<8x128xf32>
    %206 = arith.negf %205 : vector<8x128xf32>
    %207 = math.exp %206 : vector<8x128xf32>
    %cst_34 = arith.constant 1.000000e+00 : f32
    %208 = vector.broadcast %cst_34 : f32 to vector<8x128xf32>
    %209 = arith.addf %208, %207 : vector<8x128xf32>
    %210 = arith.divf %208, %209 : vector<8x128xf32>
    %211 = vector.extract_strided_slice %190 {offsets = [0, 256], sizes = [8, 128], strides = [1, 1]} : vector<8x384xf32> to vector<8x128xf32>
    %212 = vector.extract_strided_slice %194 {offsets = [0, 256], sizes = [8, 128], strides = [1, 1]} : vector<8x384xf32> to vector<8x128xf32>
    %213 = arith.mulf %202, %212 : vector<8x128xf32>
    %214 = arith.addf %211, %213 : vector<8x128xf32>
    %215 = math.tanh %214 : vector<8x128xf32>
    %cst_35 = arith.constant 1.000000e+00 : f32
    %216 = vector.broadcast %cst_35 : f32 to vector<8x128xf32>
    %217 = arith.subf %216, %210 : vector<8x128xf32>
    %218 = arith.mulf %217, %215 : vector<8x128xf32>
    %219 = arith.mulf %210, %189 : vector<8x128xf32>
    %220 = arith.addf %218, %219 : vector<8x128xf32>
    %c5_i32 = arith.constant 5 : i32
    %221 = vector.broadcast %c5_i32 : i32 to vector<8x1xi32>
    %222 = arith.cmpi sgt, %0, %221 : vector<8x1xi32>
    %223 = vector.shape_cast %222 : vector<8x1xi1> to vector<8x1xi1>
    %224 = vector.broadcast %223 : vector<8x1xi1> to vector<8x128xi1>
    %225 = arith.select %224, %220, %189 : vector<8x128xi1>, vector<8x128xf32>
    %c0_36 = arith.constant 0 : index
    %c0_37 = arith.constant 0 : index
    %226 = vector.load %arg6[%c0_36, %c0_37] : memref<8x128xf32, #tpu.memory_space<vmem>>, vector<8x128xf32>
    tpu.vector_store %arg6[%c0_36, %c0_37], %225 {strides = array<i32>} : memref<8x128xf32, #tpu.memory_space<vmem>>, vector<8x128xf32>,
    return
  }
}

</mosaic_0001>

<llo_original>
// kernel: tpu_custom_call.1
$region0: #{tpu_custom_call.1}
  #allocation0 [shape = 'u32[]', space=smem, size = 0x4, offset = 0x4, fixed_abs, tag = 'smem constant byte address 0x4 - core index']
  #allocation1 [shape = 'u32[144,128]{1,0:T(1,128)}', space=vmem, size = 0x12000, scoped, tag = 'internal scratch']
  %s0 = inlined_call_operand.hbm [shape: bf16[48,128], index: 0, kind: input, shape index: {}]
  %s1 = inlined_call_operand.vmem [shape: s32[8,1], index: 1, kind: input, shape index: {}]
  %s2 = inlined_call_operand.hbm [shape: bf16[128,384], index: 2, kind: input, shape index: {}]
  %s3 = inlined_call_operand.hbm [shape: bf16[128,384], index: 3, kind: input, shape index: {}]
  %s4 = inlined_call_operand.vmem [shape: f32[1,384], index: 4, kind: input, shape index: {}]
  %s5 = inlined_call_operand.vmem [shape: f32[1,384], index: 5, kind: input, shape index: {}]
  %s6 = inlined_call_operand.hbm [shape: f32[8,128], index: 6, kind: output, shape index: {}]
  %s7 = sld [smem:[#allocation0]]
  $region46: #{tpu_custom_call.1} parent=0
    _
  %s9 = ssub.s32 1, %s7
  %s10 = scalar_select 0, %s9, %s7
  $region1: #{tpu_custom_call.1} parent=0
    #allocation2 [shape = 'u8[12288]{0}', space=vmem, size = 0x3000, scoped, tag = 'input window, operand 0, single buffered']
    #allocation3 [shape = 's32[1]{0}', space=sflag, size = 0x4, scoped, tag = 'scoped memory for tpu_custom_call.1']
    #allocation4 [shape = 's32[1]{0}', space=sflag, size = 0x4, scoped, tag = 'scoped memory for tpu_custom_call.1']
    #allocation5 [shape = 'u8[98304]{0}', space=vmem, size = 0x18000, scoped, tag = 'input window, operand 2, single buffered']
    #allocation6 [shape = 's32[1]{0}', space=sflag, size = 0x4, scoped, tag = 'scoped memory for tpu_custom_call.1']
    #allocation7 [shape = 'u8[98304]{0}', space=vmem, size = 0x18000, scoped, tag = 'input window, operand 3, single buffered']
    #allocation8 [shape = 'u8[4096]{0}', space=vmem, size = 0x1000, scoped, tag = 'output window, operand 0, single buffered']
    %11 = vsyncpa [#allocation3], 0
    %12 = vsyncpa [#allocation6], 0
    %13 = vsyncpa [#allocation4], 0
    // Predicated region
    $region2: #{tpu_custom_call.1} parent=1 // pred_check
      _
    $region3: #{tpu_custom_call.1} parent=1 // pred_check_branch
      %15 = sbr.rel (0) target = $region5
    $region4: #{tpu_custom_call.1} parent=1 // pred_region
      %s17 = ssub.s32 384, 384
      %18 = vsyncadd [#allocation3], %s17
      %s19 = sshll.u32 [#allocation2], 4
      %s20 = int_to_ptr.vmem [resolvable:$true] %s19
      %25 = dma.hbm_to_vmem [thread:$0]  %s0, 384, %s20, [#allocation3], 64, 64, 4
    $region5: #{tpu_custom_call.1} parent=1 // pred_fallthru
      _
    // Predicated region
    $region6: #{tpu_custom_call.1} parent=1 // pred_check
      _
    $region7: #{tpu_custom_call.1} parent=1 // pred_check_branch
      %27 = sbr.rel (0) target = $region9
    $region8: #{tpu_custom_call.1} parent=1 // pred_region
      _
    $region9: #{tpu_custom_call.1} parent=1 // pred_fallthru
      _
    // Predicated region
    $region10: #{tpu_custom_call.1} parent=1 // pred_check
      _
    $region11: #{tpu_custom_call.1} parent=1 // pred_check_branch
      %29 = sbr.rel (0) target = $region13
    $region12: #{tpu_custom_call.1} parent=1 // pred_region
      %s31 = ssub.s32 3072, 3072
      %32 = vsyncadd [#allocation6], %s31
      %s33 = sshll.u32 [#allocation5], 4
      %s34 = int_to_ptr.vmem [resolvable:$true] %s33
      %39 = dma.hbm_to_vmem [thread:$0]  %s2, 3072, %s34, [#allocation6], 192, 192, 12
    $region13: #{tpu_custom_call.1} parent=1 // pred_fallthru
      _
    // Predicated region
    $region14: #{tpu_custom_call.1} parent=1 // pred_check
      _
    $region15: #{tpu_custom_call.1} parent=1 // pred_check_branch
      %41 = sbr.rel (0) target = $region17
    $region16: #{tpu_custom_call.1} parent=1 // pred_region
      %s43 = ssub.s32 3072, 3072
      %44 = vsyncadd [#allocation6], %s43
      %s45 = sshll.u32 [#allocation7], 4
      %s46 = int_to_ptr.vmem [resolvable:$true] %s45
      %51 = dma.hbm_to_vmem [thread:$0]  %s3, 3072, %s46, [#allocation6], 192, 192, 12
    $region17: #{tpu_custom_call.1} parent=1 // pred_fallthru
      _
    // Predicated region
    $region18: #{tpu_custom_call.1} parent=1 // pred_check
      _
    $region19: #{tpu_custom_call.1} parent=1 // pred_check_branch
      %53 = sbr.rel (0) target = $region21
    $region20: #{tpu_custom_call.1} parent=1 // pred_region
      _
    $region21: #{tpu_custom_call.1} parent=1 // pred_fallthru
      _
    // Predicated region
    $region22: #{tpu_custom_call.1} parent=1 // pred_check
      _
    $region23: #{tpu_custom_call.1} parent=1 // pred_check_branch
      %55 = sbr.rel (0) target = $region25
    $region24: #{tpu_custom_call.1} parent=1 // pred_region
      _
    $region25: #{tpu_custom_call.1} parent=1 // pred_fallthru
      _
    // Predicated region
    $region26: #{tpu_custom_call.1} parent=1 // pred_check
      _
    $region27: #{tpu_custom_call.1} parent=1 // pred_check_branch
      %57 = sbr.rel (0) target = $region29
    $region28: #{tpu_custom_call.1} parent=1 // pred_region
      %58 = dma.done [#allocation3], 384
    $region29: #{tpu_custom_call.1} parent=1 // pred_fallthru
      _
    // Predicated region
    $region30: #{tpu_custom_call.1} parent=1 // pred_check
      _
    $region31: #{tpu_custom_call.1} parent=1 // pred_check_branch
      %60 = sbr.rel (0) target = $region33
    $region32: #{tpu_custom_call.1} parent=1 // pred_region
      %61 = dma.done [#allocation6], 3072
    $region33: #{tpu_custom_call.1} parent=1 // pred_fallthru
      _
    // Predicated region
    $region34: #{tpu_custom_call.1} parent=1 // pred_check
      _
    $region35: #{tpu_custom_call.1} parent=1 // pred_check_branch
      %63 = sbr.rel (0) target = $region37
    $region36: #{tpu_custom_call.1} parent=1 // pred_region
      %64 = dma.done [#allocation6], 3072
    $region37: #{tpu_custom_call.1} parent=1 // pred_fallthru
      _
    %v66 = vld [vmem:[%s1] sm:$0xff]
    %v67 = vld [vmem:[#allocation7] sm:$0xff]
    %v68 = vld [vmem:[#allocation7 + $0x8] sm:$0xf]
    %v69 = vld [vmem:[#allocation7 + $0xc] sm:$0xff]
    %v70 = vld [vmem:[#allocation7 + $0x14] sm:$0xf]
    %v71 = vld [vmem:[#allocation7 + $0x18] sm:$0xff]
    %v72 = vld [vmem:[#allocation7 + $0x20] sm:$0xf]
    %v73 = vld [vmem:[#allocation7 + $0x24] sm:$0xff]
    %v74 = vld [vmem:[#allocation7 + $0x2c] sm:$0xf]
    %v75 = vld [vmem:[#allocation7 + $0x30] sm:$0xff]
    %v76 = vld [vmem:[#allocation7 + $0x38] sm:$0xf]
    %v77 = vld [vmem:[#allocation7 + $0x3c] sm:$0xff]
    %v78 = vld [vmem:[#allocation7 + $0x44] sm:$0xf]
    %v79 = vld [vmem:[#allocation7 + $0x48] sm:$0xff]
    %v80 = vld [vmem:[#allocation7 + $0x50] sm:$0xf]
    %v81 = vld [vmem:[#allocation7 + $0x54] sm:$0xff]
    %v82 = vld [vmem:[#allocation7 + $0x5c] sm:$0xf]
    %v83 = vld [vmem:[#allocation7 + $0x60] sm:$0xff]
    %v84 = vld [vmem:[#allocation7 + $0x68] sm:$0xf]
    %v85 = vld [vmem:[#allocation7 + $0x6c] sm:$0xff]
    %v86 = vld [vmem:[#allocation7 + $0x74] sm:$0xf]
    %v87 = vld [vmem:[#allocation7 + $0x78] sm:$0xff]
    %v88 = vld [vmem:[#allocation7 + $0x80] sm:$0xf]
    %v89 = vld [vmem:[#allocation7 + $0x84] sm:$0xff]
    %v90 = vld [vmem:[#allocation7 + $0x8c] sm:$0xf]
    %v91 = vld [vmem:[#allocation7 + $0x90] sm:$0xff]
    %v92 = vld [vmem:[#allocation7 + $0x98] sm:$0xf]
    %v93 = vld [vmem:[#allocation7 + $0x9c] sm:$0xff]
    %v94 = vld [vmem:[#allocation7 + $0xa4] sm:$0xf]
    %v95 = vld [vmem:[#allocation7 + $0xa8] sm:$0xff]
    %v96 = vld [vmem:[#allocation7 + $0xb0] sm:$0xf]
    %v97 = vld [vmem:[#allocation7 + $0xb4] sm:$0xff]
    %v98 = vld [vmem:[#allocation7 + $0xbc] sm:$0xf]
    %v99 = vld [vmem:[%s5] sm:$0x7]
    %v100 = vld [vmem:[#allocation2] sm:$0xf]
    %v101 = vld [vmem:[#allocation2 + $0x4] sm:$0xf]
    %v102 = vld [vmem:[#allocation2 + $0x8] sm:$0xf]
    %v103 = vld [vmem:[#allocation2 + $0xc] sm:$0xf]
    %v104 = vld [vmem:[#allocation2 + $0x10] sm:$0xf]
    %v105 = vld [vmem:[#allocation2 + $0x14] sm:$0xf]
    %v106 = vld [vmem:[#allocation5] sm:$0xff]
    %v107 = vld [vmem:[#allocation5 + $0x8] sm:$0xf]
    %v108 = vld [vmem:[#allocation5 + $0xc] sm:$0xff]
    %v109 = vld [vmem:[#allocation5 + $0x14] sm:$0xf]
    %v110 = vld [vmem:[#allocation5 + $0x18] sm:$0xff]
    %v111 = vld [vmem:[#allocation5 + $0x20] sm:$0xf]
    %v112 = vld [vmem:[#allocation5 + $0x24] sm:$0xff]
    %v113 = vld [vmem:[#allocation5 + $0x2c] sm:$0xf]
    %v114 = vld [vmem:[#allocation5 + $0x30] sm:$0xff]
    %v115 = vld [vmem:[#allocation5 + $0x38] sm:$0xf]
    %v116 = vld [vmem:[#allocation5 + $0x3c] sm:$0xff]
    %v117 = vld [vmem:[#allocation5 + $0x44] sm:$0xf]
    %v118 = vld [vmem:[#allocation5 + $0x48] sm:$0xff]
    %v119 = vld [vmem:[#allocation5 + $0x50] sm:$0xf]
    %v120 = vld [vmem:[#allocation5 + $0x54] sm:$0xff]
    %v121 = vld [vmem:[#allocation5 + $0x5c] sm:$0xf]
    %v122 = vld [vmem:[#allocation5 + $0x60] sm:$0xff]
    %v123 = vld [vmem:[#allocation5 + $0x68] sm:$0xf]
    %v124 = vld [vmem:[#allocation5 + $0x6c] sm:$0xff]
    %v125 = vld [vmem:[#allocation5 + $0x74] sm:$0xf]
    %v126 = vld [vmem:[#allocation5 + $0x78] sm:$0xff]
    %v127 = vld [vmem:[#allocation5 + $0x80] sm:$0xf]
    %v128 = vld [vmem:[#allocation5 + $0x84] sm:$0xff]
    %v129 = vld [vmem:[#allocation5 + $0x8c] sm:$0xf]
    %v130 = vld [vmem:[#allocation5 + $0x90] sm:$0xff]
    %v131 = vld [vmem:[#allocation5 + $0x98] sm:$0xf]
    %v132 = vld [vmem:[#allocation5 + $0x9c] sm:$0xff]
    %v133 = vld [vmem:[#allocation5 + $0xa4] sm:$0xf]
    %v134 = vld [vmem:[#allocation5 + $0xa8] sm:$0xff]
    %v135 = vld [vmem:[#allocation5 + $0xb0] sm:$0xf]
    %v136 = vld [vmem:[#allocation5 + $0xb4] sm:$0xff]
    %v137 = vld [vmem:[#allocation5 + $0xbc] sm:$0xf]
    %v138 = vld [vmem:[%s4] sm:$0x7]
    %v140 = vlaneseq
    %v141 = vshrl.u32 %v140, 7
    %v142 = vsub.s32 0, %v141
    %v143 = vrot.slane %v138, %v142
    %v144 = vlaneseq
    %v145 = vshrl.u32 %v144, 7
    %v146 = vsub.s32 1, %v145
    %v147 = vrot.slane %v138, %v146
    %v148 = vlaneseq
    %v149 = vshrl.u32 %v148, 7
    %v150 = vsub.s32 2, %v149
    %v151 = vrot.slane %v138, %v150
    %v161 = vunpack.c.l.b16 %v100
    %v162 = vunpack.c.l.b16 %v101
    %v163 = vunpack.c.l.b16 %v102
    %v164 = vunpack.c.l.b16 %v103
    %v165 = vunpack.c.l.b16 %v104
    %v166 = vunpack.c.l.b16 %v105
    %v167 = vpack.c.b16 %v162, %v161
    %v168 = vpack.c.b16 %v164, %v163
    %v169 = vpack.c.b16 %v166, %v165
    %v205 = vunpack.c.l.b16 %v106
    %v206 = vunpack.c.h.b16 %v106
    %v207 = vunpack.c.l.b16 %v107
    %v208 = vunpack.c.l.b16 %v108
    %v209 = vunpack.c.h.b16 %v108
    %v210 = vunpack.c.l.b16 %v109
    %v211 = vunpack.c.l.b16 %v110
    %v212 = vunpack.c.h.b16 %v110
    %v213 = vunpack.c.l.b16 %v111
    %v214 = vunpack.c.l.b16 %v112
    %v215 = vunpack.c.h.b16 %v112
    %v216 = vunpack.c.l.b16 %v113
    %v217 = vunpack.c.l.b16 %v114
    %v218 = vunpack.c.h.b16 %v114
    %v219 = vunpack.c.l.b16 %v115
    %v220 = vunpack.c.l.b16 %v116
    %v221 = vunpack.c.h.b16 %v116
    %v222 = vunpack.c.l.b16 %v117
    %v223 = vunpack.c.l.b16 %v118
    %v224 = vunpack.c.h.b16 %v118
    %v225 = vunpack.c.l.b16 %v119
    %v226 = vunpack.c.l.b16 %v120
    %v227 = vunpack.c.h.b16 %v120
    %v228 = vunpack.c.l.b16 %v121
    %v229 = vunpack.c.l.b16 %v122
    %v230 = vunpack.c.h.b16 %v122
    %v231 = vunpack.c.l.b16 %v123
    %v232 = vunpack.c.l.b16 %v124
    %v233 = vunpack.c.h.b16 %v124
    %v234 = vunpack.c.l.b16 %v125
    %v235 = vunpack.c.l.b16 %v126
    %v236 = vunpack.c.h.b16 %v126
    %v237 = vunpack.c.l.b16 %v127
    %v238 = vunpack.c.l.b16 %v128
    %v239 = vunpack.c.h.b16 %v128
    %v240 = vunpack.c.l.b16 %v129
    %v241 = vunpack.c.l.b16 %v130
    %v242 = vunpack.c.h.b16 %v130
    %v243 = vunpack.c.l.b16 %v131
    %v244 = vunpack.c.l.b16 %v132
    %v245 = vunpack.c.h.b16 %v132
    %v246 = vunpack.c.l.b16 %v133
    %v247 = vunpack.c.l.b16 %v134
    %v248 = vunpack.c.h.b16 %v134
    %v249 = vunpack.c.l.b16 %v135
    %v250 = vunpack.c.l.b16 %v136
    %v251 = vunpack.c.h.b16 %v136
    %v252 = vunpack.c.l.b16 %v137
    %v253 = vpack.c.b16 %v208, %v205
    %v254 = vpack.c.b16 %v209, %v206
    %v255 = vpack.c.b16 %v210, %v207
    %v256 = vpack.c.b16 %v214, %v211
    %v257 = vpack.c.b16 %v215, %v212
    %v258 = vpack.c.b16 %v216, %v213
    %v259 = vpack.c.b16 %v220, %v217
    %v260 = vpack.c.b16 %v221, %v218
    %v261 = vpack.c.b16 %v222, %v219
    %v262 = vpack.c.b16 %v226, %v223
    %v263 = vpack.c.b16 %v227, %v224
    %v264 = vpack.c.b16 %v228, %v225
    %v265 = vpack.c.b16 %v232, %v229
    %v266 = vpack.c.b16 %v233, %v230
    %v267 = vpack.c.b16 %v234, %v231
    %v268 = vpack.c.b16 %v238, %v235
    %v269 = vpack.c.b16 %v239, %v236
    %v270 = vpack.c.b16 %v240, %v237
    %v271 = vpack.c.b16 %v244, %v241
    %v272 = vpack.c.b16 %v245, %v242
    %v273 = vpack.c.b16 %v246, %v243
    %v274 = vpack.c.b16 %v250, %v247
    %v275 = vpack.c.b16 %v251, %v248
    %v276 = vpack.c.b16 %v252, %v249
    %301 = vmatprep.subr.bf16.mxu0 %v254
    %302 = vmatpush1.bf16.msra.mxu0 %v253
    %303 = vmatprep.subr.bf16.mxu0 %v257
    %304 = vmatpush1.bf16.msra.mxu0 %v256
    %305 = vmatprep.subr.bf16.mxu0 %v260
    %306 = vmatpush1.bf16.msra.mxu0 %v259
    %307 = vmatprep.subr.bf16.mxu0 %v263
    %308 = vmatpush1.bf16.msra.mxu0 %v262
    %309 = vmatprep.subr.bf16.mxu0 %v266
    %310 = vmatpush1.bf16.msra.mxu0 %v265
    %311 = vmatprep.subr.bf16.mxu0 %v269
    %312 = vmatpush1.bf16.msra.mxu0 %v268
    %313 = vmatprep.subr.bf16.mxu0 %v272
    %314 = vmatpush1.bf16.msra.mxu0 %v271
    %315 = vmatprep.subr.bf16.mxu0 %v275
    %316 = vmatpush1.bf16.msra.mxu0 %v274
    %317 = vmatprep.subr.bf16.mxu0 0
    %318 = vmatpush1.bf16.msra.mxu0 0
    %319 = vmatprep.subr.bf16.mxu0 0
    %320 = vmatpush1.bf16.msra.mxu0 0
    %321 = vmatprep.subr.bf16.mxu0 0
    %322 = vmatpush1.bf16.msra.mxu0 0
    %323 = vmatprep.subr.bf16.mxu0 0
    %324 = vmatpush1.bf16.msra.mxu0 0
    %325 = vmatprep.subr.bf16.mxu0 0
    %326 = vmatpush1.bf16.msra.mxu0 0
    %327 = vmatprep.subr.bf16.mxu0 0
    %328 = vmatpush1.bf16.msra.mxu0 0
    %329 = vmatprep.subr.bf16.mxu0 0
    %330 = vmatpush1.bf16.msra.mxu0 0
    %331 = vmatprep.subr.bf16.mxu0 0
    %332 = vmatpush1.bf16.msra.mxu0 0
    %333 = vmatprep.mubr.bf16.mxu0 0
    %334 = vmatmul.mubr.bf16.gmra.mrb[0].mxu0 %v167
    %v335 = vpop.f32.mrb[0].mxu0
    %v336 = vadd.f32 %v143, %v335
    %v337 = vpop.f32.mrb[0].mxu0
    %v338 = vadd.f32 %v147, %v337
    %v339 = vpop.f32.mrb[0].mxu0
    %v340 = vadd.f32 %v143, %v339
    %v341 = vpop.f32.mrb[0].mxu0
    %v342 = vadd.f32 %v147, %v341
    %343 = vmatprep.mubr.bf16.mxu0 0
    %344 = vmatmul.mubr.bf16.gmra.mrb[0].mxu0 %v168
    %v345 = vpop.f32.mrb[0].mxu0
    %v346 = vadd.f32 %v143, %v345
    %v347 = vpop.f32.mrb[0].mxu0
    %v348 = vadd.f32 %v147, %v347
    %v349 = vpop.f32.mrb[0].mxu0
    %v350 = vadd.f32 %v143, %v349
    %v351 = vpop.f32.mrb[0].mxu0
    %v352 = vadd.f32 %v147, %v351
    %353 = vmatprep.mubr.bf16.mxu0 0
    %354 = vmatmul.mubr.bf16.gmra.mrb[0].mxu0 %v169
    %v355 = vpop.f32.mrb[0].mxu0
    %v356 = vadd.f32 %v143, %v355
    %v357 = vpop.f32.mrb[0].mxu0
    %v358 = vadd.f32 %v147, %v357
    %v359 = vpop.f32.mrb[0].mxu0
    %v360 = vadd.f32 %v143, %v359
    %v361 = vpop.f32.mrb[0].mxu0
    %v362 = vadd.f32 %v147, %v361
    %363 = vdwg.mxu0
    %364 = vmatprep.subr.bf16.mxu0 0
    %365 = vmatpush1.bf16.msra.mxu0 %v255
    %366 = vmatprep.subr.bf16.mxu0 0
    %367 = vmatpush1.bf16.msra.mxu0 %v258
    %368 = vmatprep.subr.bf16.mxu0 0
    %369 = vmatpush1.bf16.msra.mxu0 %v261
    %370 = vmatprep.subr.bf16.mxu0 0
    %371 = vmatpush1.bf16.msra.mxu0 %v264
    %372 = vmatprep.subr.bf16.mxu0 0
    %373 = vmatpush1.bf16.msra.mxu0 %v267
    %374 = vmatprep.subr.bf16.mxu0 0
    %375 = vmatpush1.bf16.msra.mxu0 %v270
    %376 = vmatprep.subr.bf16.mxu0 0
    %377 = vmatpush1.bf16.msra.mxu0 %v273
    %378 = vmatprep.subr.bf16.mxu0 0
    %379 = vmatpush1.bf16.msra.mxu0 %v276
    %380 = vmatprep.subr.bf16.mxu0 0
    %381 = vmatpush1.bf16.msra.mxu0 0
    %382 = vmatprep.subr.bf16.mxu0 0
    %383 = vmatpush1.bf16.msra.mxu0 0
    %384 = vmatprep.subr.bf16.mxu0 0
    %385 = vmatpush1.bf16.msra.mxu0 0
    %386 = vmatprep.subr.bf16.mxu0 0
    %387 = vmatpush1.bf16.msra.mxu0 0
    %388 = vmatprep.subr.bf16.mxu0 0
    %389 = vmatpush1.bf16.msra.mxu0 0
    %390 = vmatprep.subr.bf16.mxu0 0
    %391 = vmatpush1.bf16.msra.mxu0 0
    %392 = vmatprep.subr.bf16.mxu0 0
    %393 = vmatpush1.bf16.msra.mxu0 0
    %394 = vmatprep.subr.bf16.mxu0 0
    %395 = vmatpush1.bf16.msra.mxu0 0
    %396 = vmatprep.mubr.bf16.mxu0 0
    %397 = vmatmul.mubr.bf16.gmra.mrb[0].mxu0 %v167
    %v398 = vpop.f32.mrb[0].mxu0
    %v399 = vadd.f32 %v151, %v398
    %v400 = vpop.f32.mrb[0].mxu0
    %v401 = vpop.f32.mrb[0].mxu0
    %v402 = vadd.f32 %v151, %v401
    %v403 = vpop.f32.mrb[0].mxu0
    %404 = vmatprep.mubr.bf16.mxu0 0
    %405 = vmatmul.mubr.bf16.gmra.mrb[0].mxu0 %v168
    %v406 = vpop.f32.mrb[0].mxu0
    %v407 = vadd.f32 %v151, %v406
    %v408 = vpop.f32.mrb[0].mxu0
    %v409 = vpop.f32.mrb[0].mxu0
    %v410 = vadd.f32 %v151, %v409
    %v411 = vpop.f32.mrb[0].mxu0
    %412 = vmatprep.mubr.bf16.mxu0 0
    %413 = vmatmul.mubr.bf16.gmra.mrb[0].mxu0 %v169
    %v414 = vpop.f32.mrb[0].mxu0
    %v415 = vadd.f32 %v151, %v414
    %v416 = vpop.f32.mrb[0].mxu0
    %v417 = vpop.f32.mrb[0].mxu0
    %v418 = vadd.f32 %v151, %v417
    %v419 = vpop.f32.mrb[0].mxu0
    %420 = vdwg.mxu0
    %v422 = vlaneseq
    %v423 = vshrl.u32 %v422, 7
    %v424 = vsub.s32 0, %v423
    %v425 = vrot.slane %v99, %v424
    %v426 = vlaneseq
    %v427 = vshrl.u32 %v426, 7
    %v428 = vsub.s32 1, %v427
    %v429 = vrot.slane %v99, %v428
    %v430 = vlaneseq
    %v431 = vshrl.u32 %v430, 7
    %v432 = vsub.s32 2, %v431
    %v433 = vrot.slane %v99, %v432
    %v469 = vunpack.c.l.b16 %v67
    %v470 = vunpack.c.h.b16 %v67
    %v471 = vunpack.c.l.b16 %v68
    %v472 = vunpack.c.l.b16 %v69
    %v473 = vunpack.c.h.b16 %v69
    %v474 = vunpack.c.l.b16 %v70
    %v475 = vunpack.c.l.b16 %v71
    %v476 = vunpack.c.h.b16 %v71
    %v477 = vunpack.c.l.b16 %v72
    %v478 = vunpack.c.l.b16 %v73
    %v479 = vunpack.c.h.b16 %v73
    %v480 = vunpack.c.l.b16 %v74
    %v481 = vunpack.c.l.b16 %v75
    %v482 = vunpack.c.h.b16 %v75
    %v483 = vunpack.c.l.b16 %v76
    %v484 = vunpack.c.l.b16 %v77
    %v485 = vunpack.c.h.b16 %v77
    %v486 = vunpack.c.l.b16 %v78
    %v487 = vunpack.c.l.b16 %v79
    %v488 = vunpack.c.h.b16 %v79
    %v489 = vunpack.c.l.b16 %v80
    %v490 = vunpack.c.l.b16 %v81
    %v491 = vunpack.c.h.b16 %v81
    %v492 = vunpack.c.l.b16 %v82
    %v493 = vunpack.c.l.b16 %v83
    %v494 = vunpack.c.h.b16 %v83
    %v495 = vunpack.c.l.b16 %v84
    %v496 = vunpack.c.l.b16 %v85
    %v497 = vunpack.c.h.b16 %v85
    %v498 = vunpack.c.l.b16 %v86
    %v499 = vunpack.c.l.b16 %v87
    %v500 = vunpack.c.h.b16 %v87
    %v501 = vunpack.c.l.b16 %v88
    %v502 = vunpack.c.l.b16 %v89
    %v503 = vunpack.c.h.b16 %v89
    %v504 = vunpack.c.l.b16 %v90
    %v505 = vunpack.c.l.b16 %v91
    %v506 = vunpack.c.h.b16 %v91
    %v507 = vunpack.c.l.b16 %v92
    %v508 = vunpack.c.l.b16 %v93
    %v509 = vunpack.c.h.b16 %v93
    %v510 = vunpack.c.l.b16 %v94
    %v511 = vunpack.c.l.b16 %v95
    %v512 = vunpack.c.h.b16 %v95
    %v513 = vunpack.c.l.b16 %v96
    %v514 = vunpack.c.l.b16 %v97
    %v515 = vunpack.c.h.b16 %v97
    %v516 = vunpack.c.l.b16 %v98
    %v517 = vpack.c.b16 %v472, %v469
    %v518 = vpack.c.b16 %v473, %v470
    %v519 = vpack.c.b16 %v474, %v471
    %v520 = vpack.c.b16 %v478, %v475
    %v521 = vpack.c.b16 %v479, %v476
    %v522 = vpack.c.b16 %v480, %v477
    %v523 = vpack.c.b16 %v484, %v481
    %v524 = vpack.c.b16 %v485, %v482
    %v525 = vpack.c.b16 %v486, %v483
    %v526 = vpack.c.b16 %v490, %v487
    %v527 = vpack.c.b16 %v491, %v488
    %v528 = vpack.c.b16 %v492, %v489
    %v529 = vpack.c.b16 %v496, %v493
    %v530 = vpack.c.b16 %v497, %v494
    %v531 = vpack.c.b16 %v498, %v495
    %v532 = vpack.c.b16 %v502, %v499
    %v533 = vpack.c.b16 %v503, %v500
    %v534 = vpack.c.b16 %v504, %v501
    %v535 = vpack.c.b16 %v508, %v505
    %v536 = vpack.c.b16 %v509, %v506
    %v537 = vpack.c.b16 %v510, %v507
    %v538 = vpack.c.b16 %v514, %v511
    %v539 = vpack.c.b16 %v515, %v512
    %v540 = vpack.c.b16 %v516, %v513
    %565 = vmatprep.subr.bf16.mxu0 %v518
    %566 = vmatpush1.bf16.msra.mxu0 %v517
    %567 = vmatprep.subr.bf16.mxu0 %v521
    %568 = vmatpush1.bf16.msra.mxu0 %v520
    %569 = vmatprep.subr.bf16.mxu0 %v524
    %570 = vmatpush1.bf16.msra.mxu0 %v523
    %571 = vmatprep.subr.bf16.mxu0 %v527
    %572 = vmatpush1.bf16.msra.mxu0 %v526
    %573 = vmatprep.subr.bf16.mxu0 %v530
    %574 = vmatpush1.bf16.msra.mxu0 %v529
    %575 = vmatprep.subr.bf16.mxu0 %v533
    %576 = vmatpush1.bf16.msra.mxu0 %v532
    %577 = vmatprep.subr.bf16.mxu0 %v536
    %578 = vmatpush1.bf16.msra.mxu0 %v535
    %579 = vmatprep.subr.bf16.mxu0 %v539
    %580 = vmatpush1.bf16.msra.mxu0 %v538
    %581 = vmatprep.subr.bf16.mxu0 0
    %582 = vmatpush1.bf16.msra.mxu0 0
    %583 = vmatprep.subr.bf16.mxu0 0
    %584 = vmatpush1.bf16.msra.mxu0 0
    %585 = vmatprep.subr.bf16.mxu0 0
    %586 = vmatpush1.bf16.msra.mxu0 0
    %587 = vmatprep.subr.bf16.mxu0 0
    %588 = vmatpush1.bf16.msra.mxu0 0
    %589 = vmatprep.subr.bf16.mxu0 0
    %590 = vmatpush1.bf16.msra.mxu0 0
    %591 = vmatprep.subr.bf16.mxu0 0
    %592 = vmatpush1.bf16.msra.mxu0 0
    %593 = vmatprep.subr.bf16.mxu0 0
    %594 = vmatpush1.bf16.msra.mxu0 0
    %595 = vmatprep.subr.bf16.mxu0 0
    %596 = vmatpush1.bf16.msra.mxu0 0
    %597 = vmatprep.mubr.bf16.mxu0 0
    %598 = vmatmul.mubr.bf16.gmra.mrb[0].mxu0 0
    %v599 = vpop.f32.mrb[0].mxu0
    %v600 = vadd.f32 %v425, %v599
    %v601 = vpop.f32.mrb[0].mxu0
    %v602 = vadd.f32 %v429, %v601
    %v603 = vpop.f32.mrb[0].mxu0
    %v604 = vpop.f32.mrb[0].mxu0
    %605 = vdwg.mxu0
    %606 = vmatprep.subr.bf16.mxu0 0
    %607 = vmatpush1.bf16.msra.mxu0 %v519
    %608 = vmatprep.subr.bf16.mxu0 0
    %609 = vmatpush1.bf16.msra.mxu0 %v522
    %610 = vmatprep.subr.bf16.mxu0 0
    %611 = vmatpush1.bf16.msra.mxu0 %v525
    %612 = vmatprep.subr.bf16.mxu0 0
    %613 = vmatpush1.bf16.msra.mxu0 %v528
    %614 = vmatprep.subr.bf16.mxu0 0
    %615 = vmatpush1.bf16.msra.mxu0 %v531
    %616 = vmatprep.subr.bf16.mxu0 0
    %617 = vmatpush1.bf16.msra.mxu0 %v534
    %618 = vmatprep.subr.bf16.mxu0 0
    %619 = vmatpush1.bf16.msra.mxu0 %v537
    %620 = vmatprep.subr.bf16.mxu0 0
    %621 = vmatpush1.bf16.msra.mxu0 %v540
    %622 = vmatprep.subr.bf16.mxu0 0
    %623 = vmatpush1.bf16.msra.mxu0 0
    %624 = vmatprep.subr.bf16.mxu0 0
    %625 = vmatpush1.bf16.msra.mxu0 0
    %626 = vmatprep.subr.bf16.mxu0 0
    %627 = vmatpush1.bf16.msra.mxu0 0
    %628 = vmatprep.subr.bf16.mxu0 0
    %629 = vmatpush1.bf16.msra.mxu0 0
    %630 = vmatprep.subr.bf16.mxu0 0
    %631 = vmatpush1.bf16.msra.mxu0 0
    %632 = vmatprep.subr.bf16.mxu0 0
    %633 = vmatpush1.bf16.msra.mxu0 0
    %634 = vmatprep.subr.bf16.mxu0 0
    %635 = vmatpush1.bf16.msra.mxu0 0
    %636 = vmatprep.subr.bf16.mxu0 0
    %637 = vmatpush1.bf16.msra.mxu0 0
    %638 = vmatprep.mubr.bf16.mxu0 0
    %639 = vmatmul.mubr.bf16.gmra.mrb[0].mxu0 0
    %v640 = vpop.f32.mrb[0].mxu0
    %v641 = vadd.f32 %v433, %v640
    %v642 = vpop.f32.mrb[0].mxu0
    %v643 = vpop.f32.mrb[0].mxu0
    %v644 = vpop.f32.mrb[0].mxu0
    %645 = vdwg.mxu0
    %v646 = vadd.f32 %v336, %v600
    %v647 = vxor.u32 %v646, 2147483648
    %v648 = vmul.f32 %v647, 1.442695
    %v649 = vpow.pop %v648
    %v650 = vadd.f32 %v649, 1.0
    %v651 = vrcp.pop %v650
    %v652 = vmul.f32 1.0, %v651
    %v653 = vadd.f32 %v338, %v602
    %v654 = vxor.u32 %v653, 2147483648
    %v655 = vmul.f32 %v654, 1.442695
    %v656 = vpow.pop %v655
    %v657 = vadd.f32 %v656, 1.0
    %v658 = vrcp.pop %v657
    %v659 = vmul.f32 1.0, %v658
    %v660 = vmul.f32 %v652, %v641
    %v661 = vadd.f32 %v399, %v660
    %v662 = vtanh.pop %v661
    %v663 = vsub.f32 1.0, %v659
    %v664 = vmul.f32 %v663, %v662
    %v665 = vmul.f32 %v659, 0.0
    %v666 = vadd.f32 %v664, %v665
    %vm667 = vcmp.gt.s32.totalorder %v66, 0
    %v668 = vsel %vm667, 1, 0
    %669 = vset.pattern.permute.xlu0 0
    %670 = vperm.xlu0 %669, %v668
    %v671 = vpop.permute.xlu0 %670
    %vm672 = vcmp.eq.s32.totalorder %v671, 1
    %v673 = vsel %vm672, %v666, 0.0
    %v674 = vpack.c.bf16 %v673, %v673
    %675 = vmatprep.subr.bf16.mxu0 %v518
    %676 = vmatpush1.bf16.msra.mxu0 %v517
    %677 = vmatprep.subr.bf16.mxu0 %v521
    %678 = vmatpush1.bf16.msra.mxu0 %v520
    %679 = vmatprep.subr.bf16.mxu0 %v524
    %680 = vmatpush1.bf16.msra.mxu0 %v523
    %681 = vmatprep.subr.bf16.mxu0 %v527
    %682 = vmatpush1.bf16.msra.mxu0 %v526
    %683 = vmatprep.subr.bf16.mxu0 %v530
    %684 = vmatpush1.bf16.msra.mxu0 %v529
    %685 = vmatprep.subr.bf16.mxu0 %v533
    %686 = vmatpush1.bf16.msra.mxu0 %v532
    %687 = vmatprep.subr.bf16.mxu0 %v536
    %688 = vmatpush1.bf16.msra.mxu0 %v535
    %689 = vmatprep.subr.bf16.mxu0 %v539
    %690 = vmatpush1.bf16.msra.mxu0 %v538
    %691 = vmatprep.subr.bf16.mxu0 0
    %692 = vmatpush1.bf16.msra.mxu0 0
    %693 = vmatprep.subr.bf16.mxu0 0
    %694 = vmatpush1.bf16.msra.mxu0 0
    %695 = vmatprep.subr.bf16.mxu0 0
    %696 = vmatpush1.bf16.msra.mxu0 0
    %697 = vmatprep.subr.bf16.mxu0 0
    %698 = vmatpush1.bf16.msra.mxu0 0
    %699 = vmatprep.subr.bf16.mxu0 0
    %700 = vmatpush1.bf16.msra.mxu0 0
    %701 = vmatprep.subr.bf16.mxu0 0
    %702 = vmatpush1.bf16.msra.mxu0 0
    %703 = vmatprep.subr.bf16.mxu0 0
    %704 = vmatpush1.bf16.msra.mxu0 0
    %705 = vmatprep.subr.bf16.mxu0 0
    %706 = vmatpush1.bf16.msra.mxu0 0
    %707 = vmatprep.mubr.bf16.mxu0 0
    %708 = vmatmul.mubr.bf16.gmra.mrb[0].mxu0 %v674
    %v709 = vpop.f32.mrb[0].mxu0
    %v710 = vadd.f32 %v425, %v709
    %v711 = vpop.f32.mrb[0].mxu0
    %v712 = vadd.f32 %v429, %v711
    %v713 = vpop.f32.mrb[0].mxu0
    %v714 = vpop.f32.mrb[0].mxu0
    %715 = vdwg.mxu0
    %716 = vmatprep.subr.bf16.mxu0 0
    %717 = vmatpush1.bf16.msra.mxu0 %v519
    %718 = vmatprep.subr.bf16.mxu0 0
    %719 = vmatpush1.bf16.msra.mxu0 %v522
    %720 = vmatprep.subr.bf16.mxu0 0
    %721 = vmatpush1.bf16.msra.mxu0 %v525
    %722 = vmatprep.subr.bf16.mxu0 0
    %723 = vmatpush1.bf16.msra.mxu0 %v528
    %724 = vmatprep.subr.bf16.mxu0 0
    %725 = vmatpush1.bf16.msra.mxu0 %v531
    %726 = vmatprep.subr.bf16.mxu0 0
    %727 = vmatpush1.bf16.msra.mxu0 %v534
    %728 = vmatprep.subr.bf16.mxu0 0
    %729 = vmatpush1.bf16.msra.mxu0 %v537
    %730 = vmatprep.subr.bf16.mxu0 0
    %731 = vmatpush1.bf16.msra.mxu0 %v540
    %732 = vmatprep.subr.bf16.mxu0 0
    %733 = vmatpush1.bf16.msra.mxu0 0
    %734 = vmatprep.subr.bf16.mxu0 0
    %735 = vmatpush1.bf16.msra.mxu0 0
    %736 = vmatprep.subr.bf16.mxu0 0
    %737 = vmatpush1.bf16.msra.mxu0 0
    %738 = vmatprep.subr.bf16.mxu0 0
    %739 = vmatpush1.bf16.msra.mxu0 0
    %740 = vmatprep.subr.bf16.mxu0 0
    %741 = vmatpush1.bf16.msra.mxu0 0
    %742 = vmatprep.subr.bf16.mxu0 0
    %743 = vmatpush1.bf16.msra.mxu0 0
    %744 = vmatprep.subr.bf16.mxu0 0
    %745 = vmatpush1.bf16.msra.mxu0 0
    %746 = vmatprep.subr.bf16.mxu0 0
    %747 = vmatpush1.bf16.msra.mxu0 0
    %748 = vmatprep.mubr.bf16.mxu0 0
    %749 = vmatmul.mubr.bf16.gmra.mrb[0].mxu0 %v674
    %v750 = vpop.f32.mrb[0].mxu0
    %v751 = vadd.f32 %v433, %v750
    %v752 = vpop.f32.mrb[0].mxu0
    %v753 = vpop.f32.mrb[0].mxu0
    %v754 = vpop.f32.mrb[0].mxu0
    %755 = vdwg.mxu0
    %v756 = vadd.f32 %v340, %v710
    %v757 = vxor.u32 %v756, 2147483648
    %v758 = vmul.f32 %v757, 1.442695
    %v759 = vpow.pop %v758
    %v760 = vadd.f32 %v759, 1.0
    %v761 = vrcp.pop %v760
    %v762 = vmul.f32 1.0, %v761
    %v763 = vadd.f32 %v342, %v712
    %v764 = vxor.u32 %v763, 2147483648
    %v765 = vmul.f32 %v764, 1.442695
    %v766 = vpow.pop %v765
    %v767 = vadd.f32 %v766, 1.0
    %v768 = vrcp.pop %v767
    %v769 = vmul.f32 1.0, %v768
    %v770 = vmul.f32 %v762, %v751
    %v771 = vadd.f32 %v402, %v770
    %v772 = vtanh.pop %v771
    %v773 = vsub.f32 1.0, %v769
    %v774 = vmul.f32 %v773, %v772
    %v775 = vmul.f32 %v769, %v673
    %v776 = vadd.f32 %v774, %v775
    %vm777 = vcmp.gt.s32.totalorder %v66, 1
    %v778 = vsel %vm777, 1, 0
    %779 = vset.pattern.permute.xlu0 0
    %780 = vperm.xlu0 %779, %v778
    %v781 = vpop.permute.xlu0 %780
    %vm782 = vcmp.eq.s32.totalorder %v781, 1
    %v783 = vsel %vm782, %v776, %v673
    %v784 = vpack.c.bf16 %v783, %v783
    %785 = vmatprep.subr.bf16.mxu0 %v518
    %786 = vmatpush1.bf16.msra.mxu0 %v517
    %787 = vmatprep.subr.bf16.mxu0 %v521
    %788 = vmatpush1.bf16.msra.mxu0 %v520
    %789 = vmatprep.subr.bf16.mxu0 %v524
    %790 = vmatpush1.bf16.msra.mxu0 %v523
    %791 = vmatprep.subr.bf16.mxu0 %v527
    %792 = vmatpush1.bf16.msra.mxu0 %v526
    %793 = vmatprep.subr.bf16.mxu0 %v530
    %794 = vmatpush1.bf16.msra.mxu0 %v529
    %795 = vmatprep.subr.bf16.mxu0 %v533
    %796 = vmatpush1.bf16.msra.mxu0 %v532
    %797 = vmatprep.subr.bf16.mxu0 %v536
    %798 = vmatpush1.bf16.msra.mxu0 %v535
    %799 = vmatprep.subr.bf16.mxu0 %v539
    %800 = vmatpush1.bf16.msra.mxu0 %v538
    %801 = vmatprep.subr.bf16.mxu0 0
    %802 = vmatpush1.bf16.msra.mxu0 0
    %803 = vmatprep.subr.bf16.mxu0 0
    %804 = vmatpush1.bf16.msra.mxu0 0
    %805 = vmatprep.subr.bf16.mxu0 0
    %806 = vmatpush1.bf16.msra.mxu0 0
    %807 = vmatprep.subr.bf16.mxu0 0
    %808 = vmatpush1.bf16.msra.mxu0 0
    %809 = vmatprep.subr.bf16.mxu0 0
    %810 = vmatpush1.bf16.msra.mxu0 0
    %811 = vmatprep.subr.bf16.mxu0 0
    %812 = vmatpush1.bf16.msra.mxu0 0
    %813 = vmatprep.subr.bf16.mxu0 0
    %814 = vmatpush1.bf16.msra.mxu0 0
    %815 = vmatprep.subr.bf16.mxu0 0
    %816 = vmatpush1.bf16.msra.mxu0 0
    %817 = vmatprep.mubr.bf16.mxu0 0
    %818 = vmatmul.mubr.bf16.gmra.mrb[0].mxu0 %v784
    %v819 = vpop.f32.mrb[0].mxu0
    %v820 = vadd.f32 %v425, %v819
    %v821 = vpop.f32.mrb[0].mxu0
    %v822 = vadd.f32 %v429, %v821
    %v823 = vpop.f32.mrb[0].mxu0
    %v824 = vpop.f32.mrb[0].mxu0
    %825 = vdwg.mxu0
    %826 = vmatprep.subr.bf16.mxu0 0
    %827 = vmatpush1.bf16.msra.mxu0 %v519
    %828 = vmatprep.subr.bf16.mxu0 0
    %829 = vmatpush1.bf16.msra.mxu0 %v522
    %830 = vmatprep.subr.bf16.mxu0 0
    %831 = vmatpush1.bf16.msra.mxu0 %v525
    %832 = vmatprep.subr.bf16.mxu0 0
    %833 = vmatpush1.bf16.msra.mxu0 %v528
    %834 = vmatprep.subr.bf16.mxu0 0
    %835 = vmatpush1.bf16.msra.mxu0 %v531
    %836 = vmatprep.subr.bf16.mxu0 0
    %837 = vmatpush1.bf16.msra.mxu0 %v534
    %838 = vmatprep.subr.bf16.mxu0 0
    %839 = vmatpush1.bf16.msra.mxu0 %v537
    %840 = vmatprep.subr.bf16.mxu0 0
    %841 = vmatpush1.bf16.msra.mxu0 %v540
    %842 = vmatprep.subr.bf16.mxu0 0
    %843 = vmatpush1.bf16.msra.mxu0 0
    %844 = vmatprep.subr.bf16.mxu0 0
    %845 = vmatpush1.bf16.msra.mxu0 0
    %846 = vmatprep.subr.bf16.mxu0 0
    %847 = vmatpush1.bf16.msra.mxu0 0
    %848 = vmatprep.subr.bf16.mxu0 0
    %849 = vmatpush1.bf16.msra.mxu0 0
    %850 = vmatprep.subr.bf16.mxu0 0
    %851 = vmatpush1.bf16.msra.mxu0 0
    %852 = vmatprep.subr.bf16.mxu0 0
    %853 = vmatpush1.bf16.msra.mxu0 0
    %854 = vmatprep.subr.bf16.mxu0 0
    %855 = vmatpush1.bf16.msra.mxu0 0
    %856 = vmatprep.subr.bf16.mxu0 0
    %857 = vmatpush1.bf16.msra.mxu0 0
    %858 = vmatprep.mubr.bf16.mxu0 0
    %859 = vmatmul.mubr.bf16.gmra.mrb[0].mxu0 %v784
    %v860 = vpop.f32.mrb[0].mxu0
    %v861 = vadd.f32 %v433, %v860
    %v862 = vpop.f32.mrb[0].mxu0
    %v863 = vpop.f32.mrb[0].mxu0
    %v864 = vpop.f32.mrb[0].mxu0
    %865 = vdwg.mxu0
    %v866 = vadd.f32 %v346, %v820
    %v867 = vxor.u32 %v866, 2147483648
    %v868 = vmul.f32 %v867, 1.442695
    %v869 = vpow.pop %v868
    %v870 = vadd.f32 %v869, 1.0
    %v871 = vrcp.pop %v870
    %v872 = vmul.f32 1.0, %v871
    %v873 = vadd.f32 %v348, %v822
    %v874 = vxor.u32 %v873, 2147483648
    %v875 = vmul.f32 %v874, 1.442695
    %v876 = vpow.pop %v875
    %v877 = vadd.f32 %v876, 1.0
    %v878 = vrcp.pop %v877
    %v879 = vmul.f32 1.0, %v878
    %v880 = vmul.f32 %v872, %v861
    %v881 = vadd.f32 %v407, %v880
    %v882 = vtanh.pop %v881
    %v883 = vsub.f32 1.0, %v879
    %v884 = vmul.f32 %v883, %v882
    %v885 = vmul.f32 %v879, %v783
    %v886 = vadd.f32 %v884, %v885
    %vm887 = vcmp.gt.s32.totalorder %v66, 2
    %v888 = vsel %vm887, 1, 0
    %889 = vset.pattern.permute.xlu0 0
    %890 = vperm.xlu0 %889, %v888
    %v891 = vpop.permute.xlu0 %890
    %vm892 = vcmp.eq.s32.totalorder %v891, 1
    %v893 = vsel %vm892, %v886, %v783
    %v894 = vpack.c.bf16 %v893, %v893
    %895 = vmatprep.subr.bf16.mxu0 %v518
    %896 = vmatpush1.bf16.msra.mxu0 %v517
    %897 = vmatprep.subr.bf16.mxu0 %v521
    %898 = vmatpush1.bf16.msra.mxu0 %v520
    %899 = vmatprep.subr.bf16.mxu0 %v524
    %900 = vmatpush1.bf16.msra.mxu0 %v523
    %901 = vmatprep.subr.bf16.mxu0 %v527
    %902 = vmatpush1.bf16.msra.mxu0 %v526
    %903 = vmatprep.subr.bf16.mxu0 %v530
    %904 = vmatpush1.bf16.msra.mxu0 %v529
    %905 = vmatprep.subr.bf16.mxu0 %v533
    %906 = vmatpush1.bf16.msra.mxu0 %v532
    %907 = vmatprep.subr.bf16.mxu0 %v536
    %908 = vmatpush1.bf16.msra.mxu0 %v535
    %909 = vmatprep.subr.bf16.mxu0 %v539
    %910 = vmatpush1.bf16.msra.mxu0 %v538
    %911 = vmatprep.subr.bf16.mxu0 0
    %912 = vmatpush1.bf16.msra.mxu0 0
    %913 = vmatprep.subr.bf16.mxu0 0
    %914 = vmatpush1.bf16.msra.mxu0 0
    %915 = vmatprep.subr.bf16.mxu0 0
    %916 = vmatpush1.bf16.msra.mxu0 0
    %917 = vmatprep.subr.bf16.mxu0 0
    %918 = vmatpush1.bf16.msra.mxu0 0
    %919 = vmatprep.subr.bf16.mxu0 0
    %920 = vmatpush1.bf16.msra.mxu0 0
    %921 = vmatprep.subr.bf16.mxu0 0
    %922 = vmatpush1.bf16.msra.mxu0 0
    %923 = vmatprep.subr.bf16.mxu0 0
    %924 = vmatpush1.bf16.msra.mxu0 0
    %925 = vmatprep.subr.bf16.mxu0 0
    %926 = vmatpush1.bf16.msra.mxu0 0
    %927 = vmatprep.mubr.bf16.mxu0 0
    %928 = vmatmul.mubr.bf16.gmra.mrb[0].mxu0 %v894
    %v929 = vpop.f32.mrb[0].mxu0
    %v930 = vadd.f32 %v425, %v929
    %v931 = vpop.f32.mrb[0].mxu0
    %v932 = vadd.f32 %v429, %v931
    %v933 = vpop.f32.mrb[0].mxu0
    %v934 = vpop.f32.mrb[0].mxu0
    %935 = vdwg.mxu0
    %936 = vmatprep.subr.bf16.mxu0 0
    %937 = vmatpush1.bf16.msra.mxu0 %v519
    %938 = vmatprep.subr.bf16.mxu0 0
    %939 = vmatpush1.bf16.msra.mxu0 %v522
    %940 = vmatprep.subr.bf16.mxu0 0
    %941 = vmatpush1.bf16.msra.mxu0 %v525
    %942 = vmatprep.subr.bf16.mxu0 0
    %943 = vmatpush1.bf16.msra.mxu0 %v528
    %944 = vmatprep.subr.bf16.mxu0 0
    %945 = vmatpush1.bf16.msra.mxu0 %v531
    %946 = vmatprep.subr.bf16.mxu0 0
    %947 = vmatpush1.bf16.msra.mxu0 %v534
    %948 = vmatprep.subr.bf16.mxu0 0
    %949 = vmatpush1.bf16.msra.mxu0 %v537
    %950 = vmatprep.subr.bf16.mxu0 0
    %951 = vmatpush1.bf16.msra.mxu0 %v540
    %952 = vmatprep.subr.bf16.mxu0 0
    %953 = vmatpush1.bf16.msra.mxu0 0
    %954 = vmatprep.subr.bf16.mxu0 0
    %955 = vmatpush1.bf16.msra.mxu0 0
    %956 = vmatprep.subr.bf16.mxu0 0
    %957 = vmatpush1.bf16.msra.mxu0 0
    %958 = vmatprep.subr.bf16.mxu0 0
    %959 = vmatpush1.bf16.msra.mxu0 0
    %960 = vmatprep.subr.bf16.mxu0 0
    %961 = vmatpush1.bf16.msra.mxu0 0
    %962 = vmatprep.subr.bf16.mxu0 0
    %963 = vmatpush1.bf16.msra.mxu0 0
    %964 = vmatprep.subr.bf16.mxu0 0
    %965 = vmatpush1.bf16.msra.mxu0 0
    %966 = vmatprep.subr.bf16.mxu0 0
    %967 = vmatpush1.bf16.msra.mxu0 0
    %968 = vmatprep.mubr.bf16.mxu0 0
    %969 = vmatmul.mubr.bf16.gmra.mrb[0].mxu0 %v894
    %v970 = vpop.f32.mrb[0].mxu0
    %v971 = vadd.f32 %v433, %v970
    %v972 = vpop.f32.mrb[0].mxu0
    %v973 = vpop.f32.mrb[0].mxu0
    %v974 = vpop.f32.mrb[0].mxu0
    %975 = vdwg.mxu0
    %v976 = vadd.f32 %v350, %v930
    %v977 = vxor.u32 %v976, 2147483648
    %v978 = vmul.f32 %v977, 1.442695
    %v979 = vpow.pop %v978
    %v980 = vadd.f32 %v979, 1.0
    %v981 = vrcp.pop %v980
    %v982 = vmul.f32 1.0, %v981
    %v983 = vadd.f32 %v352, %v932
    %v984 = vxor.u32 %v983, 2147483648
    %v985 = vmul.f32 %v984, 1.442695
    %v986 = vpow.pop %v985
    %v987 = vadd.f32 %v986, 1.0
    %v988 = vrcp.pop %v987
    %v989 = vmul.f32 1.0, %v988
    %v990 = vmul.f32 %v982, %v971
    %v991 = vadd.f32 %v410, %v990
    %v992 = vtanh.pop %v991
    %v993 = vsub.f32 1.0, %v989
    %v994 = vmul.f32 %v993, %v992
    %v995 = vmul.f32 %v989, %v893
    %v996 = vadd.f32 %v994, %v995
    %vm997 = vcmp.gt.s32.totalorder %v66, 3
    %v998 = vsel %vm997, 1, 0
    %999 = vset.pattern.permute.xlu0 0
    %1000 = vperm.xlu0 %999, %v998
    %v1001 = vpop.permute.xlu0 %1000
    %vm1002 = vcmp.eq.s32.totalorder %v1001, 1
    %v1003 = vsel %vm1002, %v996, %v893
    %v1004 = vpack.c.bf16 %v1003, %v1003
    %1005 = vmatprep.subr.bf16.mxu0 %v518
    %1006 = vmatpush1.bf16.msra.mxu0 %v517
    %1007 = vmatprep.subr.bf16.mxu0 %v521
    %1008 = vmatpush1.bf16.msra.mxu0 %v520
    %1009 = vmatprep.subr.bf16.mxu0 %v524
    %1010 = vmatpush1.bf16.msra.mxu0 %v523
    %1011 = vmatprep.subr.bf16.mxu0 %v527
    %1012 = vmatpush1.bf16.msra.mxu0 %v526
    %1013 = vmatprep.subr.bf16.mxu0 %v530
    %1014 = vmatpush1.bf16.msra.mxu0 %v529
    %1015 = vmatprep.subr.bf16.mxu0 %v533
    %1016 = vmatpush1.bf16.msra.mxu0 %v532
    %1017 = vmatprep.subr.bf16.mxu0 %v536
    %1018 = vmatpush1.bf16.msra.mxu0 %v535
    %1019 = vmatprep.subr.bf16.mxu0 %v539
    %1020 = vmatpush1.bf16.msra.mxu0 %v538
    %1021 = vmatprep.subr.bf16.mxu0 0
    %1022 = vmatpush1.bf16.msra.mxu0 0
    %1023 = vmatprep.subr.bf16.mxu0 0
    %1024 = vmatpush1.bf16.msra.mxu0 0
    %1025 = vmatprep.subr.bf16.mxu0 0
    %1026 = vmatpush1.bf16.msra.mxu0 0
    %1027 = vmatprep.subr.bf16.mxu0 0
    %1028 = vmatpush1.bf16.msra.mxu0 0
    %1029 = vmatprep.subr.bf16.mxu0 0
    %1030 = vmatpush1.bf16.msra.mxu0 0
    %1031 = vmatprep.subr.bf16.mxu0 0
    %1032 = vmatpush1.bf16.msra.mxu0 0
    %1033 = vmatprep.subr.bf16.mxu0 0
    %1034 = vmatpush1.bf16.msra.mxu0 0
    %1035 = vmatprep.subr.bf16.mxu0 0
    %1036 = vmatpush1.bf16.msra.mxu0 0
    %1037 = vmatprep.mubr.bf16.mxu0 0
    %1038 = vmatmul.mubr.bf16.gmra.mrb[0].mxu0 %v1004
    %v1039 = vpop.f32.mrb[0].mxu0
    %v1040 = vadd.f32 %v425, %v1039
    %v1041 = vpop.f32.mrb[0].mxu0
    %v1042 = vadd.f32 %v429, %v1041
    %v1043 = vpop.f32.mrb[0].mxu0
    %v1044 = vpop.f32.mrb[0].mxu0
    %1045 = vdwg.mxu0
    %1046 = vmatprep.subr.bf16.mxu0 0
    %1047 = vmatpush1.bf16.msra.mxu0 %v519
    %1048 = vmatprep.subr.bf16.mxu0 0
    %1049 = vmatpush1.bf16.msra.mxu0 %v522
    %1050 = vmatprep.subr.bf16.mxu0 0
    %1051 = vmatpush1.bf16.msra.mxu0 %v525
    %1052 = vmatprep.subr.bf16.mxu0 0
    %1053 = vmatpush1.bf16.msra.mxu0 %v528
    %1054 = vmatprep.subr.bf16.mxu0 0
    %1055 = vmatpush1.bf16.msra.mxu0 %v531
    %1056 = vmatprep.subr.bf16.mxu0 0
    %1057 = vmatpush1.bf16.msra.mxu0 %v534
    %1058 = vmatprep.subr.bf16.mxu0 0
    %1059 = vmatpush1.bf16.msra.mxu0 %v537
    %1060 = vmatprep.subr.bf16.mxu0 0
    %1061 = vmatpush1.bf16.msra.mxu0 %v540
    %1062 = vmatprep.subr.bf16.mxu0 0
    %1063 = vmatpush1.bf16.msra.mxu0 0
    %1064 = vmatprep.subr.bf16.mxu0 0
    %1065 = vmatpush1.bf16.msra.mxu0 0
    %1066 = vmatprep.subr.bf16.mxu0 0
    %1067 = vmatpush1.bf16.msra.mxu0 0
    %1068 = vmatprep.subr.bf16.mxu0 0
    %1069 = vmatpush1.bf16.msra.mxu0 0
    %1070 = vmatprep.subr.bf16.mxu0 0
    %1071 = vmatpush1.bf16.msra.mxu0 0
    %1072 = vmatprep.subr.bf16.mxu0 0
    %1073 = vmatpush1.bf16.msra.mxu0 0
    %1074 = vmatprep.subr.bf16.mxu0 0
    %1075 = vmatpush1.bf16.msra.mxu0 0
    %1076 = vmatprep.subr.bf16.mxu0 0
    %1077 = vmatpush1.bf16.msra.mxu0 0
    %1078 = vmatprep.mubr.bf16.mxu0 0
    %1079 = vmatmul.mubr.bf16.gmra.mrb[0].mxu0 %v1004
    %v1080 = vpop.f32.mrb[0].mxu0
    %v1081 = vadd.f32 %v433, %v1080
    %v1082 = vpop.f32.mrb[0].mxu0
    %v1083 = vpop.f32.mrb[0].mxu0
    %v1084 = vpop.f32.mrb[0].mxu0
    %1085 = vdwg.mxu0
    %v1086 = vadd.f32 %v356, %v1040
    %v1087 = vxor.u32 %v1086, 2147483648
    %v1088 = vmul.f32 %v1087, 1.442695
    %v1089 = vpow.pop %v1088
    %v1090 = vadd.f32 %v1089, 1.0
    %v1091 = vrcp.pop %v1090
    %v1092 = vmul.f32 1.0, %v1091
    %v1093 = vadd.f32 %v358, %v1042
    %v1094 = vxor.u32 %v1093, 2147483648
    %v1095 = vmul.f32 %v1094, 1.442695
    %v1096 = vpow.pop %v1095
    %v1097 = vadd.f32 %v1096, 1.0
    %v1098 = vrcp.pop %v1097
    %v1099 = vmul.f32 1.0, %v1098
    %v1100 = vmul.f32 %v1092, %v1081
    %v1101 = vadd.f32 %v415, %v1100
    %v1102 = vtanh.pop %v1101
    %v1103 = vsub.f32 1.0, %v1099
    %v1104 = vmul.f32 %v1103, %v1102
    %v1105 = vmul.f32 %v1099, %v1003
    %v1106 = vadd.f32 %v1104, %v1105
    %vm1107 = vcmp.gt.s32.totalorder %v66, 4
    %v1108 = vsel %vm1107, 1, 0
    %1109 = vset.pattern.permute.xlu0 0
    %1110 = vperm.xlu0 %1109, %v1108
    %v1111 = vpop.permute.xlu0 %1110
    %vm1112 = vcmp.eq.s32.totalorder %v1111, 1
    %v1113 = vsel %vm1112, %v1106, %v1003
    %v1114 = vpack.c.bf16 %v1113, %v1113
    %1115 = vmatprep.subr.bf16.mxu0 %v518
    %1116 = vmatpush1.bf16.msra.mxu0 %v517
    %1117 = vmatprep.subr.bf16.mxu0 %v521
    %1118 = vmatpush1.bf16.msra.mxu0 %v520
    %1119 = vmatprep.subr.bf16.mxu0 %v524
    %1120 = vmatpush1.bf16.msra.mxu0 %v523
    %1121 = vmatprep.subr.bf16.mxu0 %v527
    %1122 = vmatpush1.bf16.msra.mxu0 %v526
    %1123 = vmatprep.subr.bf16.mxu0 %v530
    %1124 = vmatpush1.bf16.msra.mxu0 %v529
    %1125 = vmatprep.subr.bf16.mxu0 %v533
    %1126 = vmatpush1.bf16.msra.mxu0 %v532
    %1127 = vmatprep.subr.bf16.mxu0 %v536
    %1128 = vmatpush1.bf16.msra.mxu0 %v535
    %1129 = vmatprep.subr.bf16.mxu0 %v539
    %1130 = vmatpush1.bf16.msra.mxu0 %v538
    %1131 = vmatprep.subr.bf16.mxu0 0
    %1132 = vmatpush1.bf16.msra.mxu0 0
    %1133 = vmatprep.subr.bf16.mxu0 0
    %1134 = vmatpush1.bf16.msra.mxu0 0
    %1135 = vmatprep.subr.bf16.mxu0 0
    %1136 = vmatpush1.bf16.msra.mxu0 0
    %1137 = vmatprep.subr.bf16.mxu0 0
    %1138 = vmatpush1.bf16.msra.mxu0 0
    %1139 = vmatprep.subr.bf16.mxu0 0
    %1140 = vmatpush1.bf16.msra.mxu0 0
    %1141 = vmatprep.subr.bf16.mxu0 0
    %1142 = vmatpush1.bf16.msra.mxu0 0
    %1143 = vmatprep.subr.bf16.mxu0 0
    %1144 = vmatpush1.bf16.msra.mxu0 0
    %1145 = vmatprep.subr.bf16.mxu0 0
    %1146 = vmatpush1.bf16.msra.mxu0 0
    %1147 = vmatprep.mubr.bf16.mxu0 0
    %1148 = vmatmul.mubr.bf16.gmra.mrb[0].mxu0 %v1114
    %v1149 = vpop.f32.mrb[0].mxu0
    %v1150 = vadd.f32 %v425, %v1149
    %v1151 = vpop.f32.mrb[0].mxu0
    %v1152 = vadd.f32 %v429, %v1151
    %v1153 = vpop.f32.mrb[0].mxu0
    %v1154 = vpop.f32.mrb[0].mxu0
    %1155 = vdwg.mxu0
    %1156 = vmatprep.subr.bf16.mxu0 0
    %1157 = vmatpush1.bf16.msra.mxu0 %v519
    %1158 = vmatprep.subr.bf16.mxu0 0
    %1159 = vmatpush1.bf16.msra.mxu0 %v522
    %1160 = vmatprep.subr.bf16.mxu0 0
    %1161 = vmatpush1.bf16.msra.mxu0 %v525
    %1162 = vmatprep.subr.bf16.mxu0 0
    %1163 = vmatpush1.bf16.msra.mxu0 %v528
    %1164 = vmatprep.subr.bf16.mxu0 0
    %1165 = vmatpush1.bf16.msra.mxu0 %v531
    %1166 = vmatprep.subr.bf16.mxu0 0
    %1167 = vmatpush1.bf16.msra.mxu0 %v534
    %1168 = vmatprep.subr.bf16.mxu0 0
    %1169 = vmatpush1.bf16.msra.mxu0 %v537
    %1170 = vmatprep.subr.bf16.mxu0 0
    %1171 = vmatpush1.bf16.msra.mxu0 %v540
    %1172 = vmatprep.subr.bf16.mxu0 0
    %1173 = vmatpush1.bf16.msra.mxu0 0
    %1174 = vmatprep.subr.bf16.mxu0 0
    %1175 = vmatpush1.bf16.msra.mxu0 0
    %1176 = vmatprep.subr.bf16.mxu0 0
    %1177 = vmatpush1.bf16.msra.mxu0 0
    %1178 = vmatprep.subr.bf16.mxu0 0
    %1179 = vmatpush1.bf16.msra.mxu0 0
    %1180 = vmatprep.subr.bf16.mxu0 0
    %1181 = vmatpush1.bf16.msra.mxu0 0
    %1182 = vmatprep.subr.bf16.mxu0 0
    %1183 = vmatpush1.bf16.msra.mxu0 0
    %1184 = vmatprep.subr.bf16.mxu0 0
    %1185 = vmatpush1.bf16.msra.mxu0 0
    %1186 = vmatprep.subr.bf16.mxu0 0
    %1187 = vmatpush1.bf16.msra.mxu0 0
    %1188 = vmatprep.mubr.bf16.mxu0 0
    %1189 = vmatmul.mubr.bf16.gmra.mrb[0].mxu0 %v1114
    %v1190 = vpop.f32.mrb[0].mxu0
    %v1191 = vadd.f32 %v433, %v1190
    %v1192 = vpop.f32.mrb[0].mxu0
    %v1193 = vpop.f32.mrb[0].mxu0
    %v1194 = vpop.f32.mrb[0].mxu0
    %1195 = vdwg.mxu0
    %v1196 = vadd.f32 %v360, %v1150
    %v1197 = vxor.u32 %v1196, 2147483648
    %v1198 = vmul.f32 %v1197, 1.442695
    %v1199 = vpow.pop %v1198
    %v1200 = vadd.f32 %v1199, 1.0
    %v1201 = vrcp.pop %v1200
    %v1202 = vmul.f32 1.0, %v1201
    %v1203 = vadd.f32 %v362, %v1152
    %v1204 = vxor.u32 %v1203, 2147483648
    %v1205 = vmul.f32 %v1204, 1.442695
    %v1206 = vpow.pop %v1205
    %v1207 = vadd.f32 %v1206, 1.0
    %v1208 = vrcp.pop %v1207
    %v1209 = vmul.f32 1.0, %v1208
    %v1210 = vmul.f32 %v1202, %v1191
    %v1211 = vadd.f32 %v418, %v1210
    %v1212 = vtanh.pop %v1211
    %v1213 = vsub.f32 1.0, %v1209
    %v1214 = vmul.f32 %v1213, %v1212
    %v1215 = vmul.f32 %v1209, %v1113
    %v1216 = vadd.f32 %v1214, %v1215
    %vm1217 = vcmp.gt.s32.totalorder %v66, 5
    %v1218 = vsel %vm1217, 1, 0
    %1219 = vset.pattern.permute.xlu0 0
    %1220 = vperm.xlu0 %1219, %v1218
    %v1221 = vpop.permute.xlu0 %1220
    %vm1222 = vcmp.eq.s32.totalorder %v1221, 1
    %v1223 = vsel %vm1222, %v1216, %v1113
    %1224 = vst [vmem:[#allocation8] sm:$0xff] %v1223
    // Predicated region
    $region38: #{tpu_custom_call.1} parent=1 // pred_check
      _
    $region39: #{tpu_custom_call.1} parent=1 // pred_check_branch
      %1226 = sbr.rel (0) target = $region41
    $region40: #{tpu_custom_call.1} parent=1 // pred_region
      %s1228 = ssub.s32 128, 128
      %1229 = vsyncadd [#allocation4], %s1228
      %s1231 = sshll.u32 [#allocation8], 4
      %s1232 = int_to_ptr.vmem [resolvable:$true] %s1231
      %1234 = dma.vmem_to_hbm [thread:$0]  %s1232, 128, %s6, [#allocation4]
    $region41: #{tpu_custom_call.1} parent=1 // pred_fallthru
      _
    // Predicated region
    $region42: #{tpu_custom_call.1} parent=1 // pred_check
      _
    $region43: #{tpu_custom_call.1} parent=1 // pred_check_branch
      %1236 = sbr.rel (0) target = $region45
    $region44: #{tpu_custom_call.1} parent=1 // pred_region
      %1237 = dma.done [#allocation4], 128
    $region45: #{tpu_custom_call.1} parent=1 // pred_fallthru
      _
    %1238 = vsyncpa [#allocation3], 1
    %1239 = vsyncpa [#allocation6], 1
    %1240 = vsyncpa [#allocation4], 1

</llo_original>
